<compile_context>
chip_gen: v5e
topology: v5e:2x2
jax: 0.10.0
libtpu: 0.0.40
codegen_flags: <defaults>
</compile_context>

<pallas_src>
import functools

import jax
import jax.numpy as jnp
from jax.experimental import pallas as pl
from jax.experimental.pallas import tpu as pltpu

KSIZE = 7
PAD = 3
CIN_CAT = 2  # [avg, max]


def _round_up(v, m):
    return -(-v // m) * m


def _spatial_attention_kernel(x_ref, w_ref, o_ref, plane, *, H, W, NB):
    """One grid step processes NB images.

    x_ref : (NB, C, H*W)  VMEM  lane-dense input block
    w_ref : (2*7*7,)      SMEM  flattened conv weight (OIHW, O=1)
    o_ref : (NB, H*W)     VMEM  lane-dense output block (one row per image)
    plane : (2, NB, Lp)   VMEM  scratch: flattened, vertically zero-padded
                                [avg, max] planes, one sublane row per image.
    """
    C = x_ref.shape[1]
    HW = H * W
    Z = PAD * W + PAD            # flat offset of the image data inside a plane row
    Lp = HW + 2 * Z              # = (H + 2*PAD) * W + 2*PAD
    inv_c = 1.0 / float(C)

    # ---- border-only zero fill (vertical conv padding).  The data region is
    # fully overwritten below on every step, so no program_id guard is needed
    # and this stays correct when the parallel axis is split across cores. ----
    for ch in range(CIN_CAT):
        plane[ch, :, 0:Z] = jnp.zeros((NB, Z), jnp.float32)
        plane[ch, :, Z + HW:Lp] = jnp.zeros((NB, Z), jnp.float32)

    # ---- channel mean / max on lane-dense (C, H*W) tiles; one dense store per
    # reduced plane (no (1,HW)->(H,W) relayout anywhere).  C is chunked so the
    # per-image live set stays bounded for production channel counts. ---------
    hw_vregs = -(-HW // 128)
    c_chunk = max(8, (32 // hw_vregs) * 8) if hw_vregs <= 32 else 8
    for n in range(NB):
        s = jnp.zeros((1, HW), jnp.float32)
        m = jnp.full((1, HW), -jnp.inf, jnp.float32)
        for c0 in range(0, C, c_chunk):
            c1 = min(C, c0 + c_chunk)
            xc = x_ref[n, c0:c1, :].astype(jnp.float32)
            s = s + jnp.sum(xc, axis=0, keepdims=True)
            m = jnp.maximum(m, jnp.max(xc, axis=0, keepdims=True))
        plane[0, n:n + 1, Z:Z + HW] = s * inv_c
        plane[1, n:n + 1, Z:Z + HW] = m

    # ---- 7x7 cross-correlation.  Tap (kh,kw) for flat output index o reads
    # plane[ch, n, o + kh*W + kw]; vertically out-of-range reads land in the
    # zero border, horizontally out-of-range reads are killed by a per-kw
    # column mask (shared by the 14 taps of a kw group).  Output lanes are
    # processed in <=512-lane chunks to cap the accumulator vreg footprint. ---
    QW = HW if HW <= 512 else 512
    for q0 in range(0, HW, QW):
        qn = min(QW, HW - q0)
        colf = (jax.lax.broadcasted_iota(jnp.int32, (1, qn), 1)
                .astype(jnp.float32) + float(q0))
        # col mod W without integer div/rem (exact for H*W < 2^23).
        wcol = colf - jnp.floor((colf + 0.5) * (1.0 / float(W))) * float(W)

        acc = jnp.zeros((NB, qn), jnp.float32)
        for kw in range(KSIZE):
            lo = max(0, PAD - kw)
            hi = min(W, W + PAD - kw)
            p0 = jnp.zeros((NB, qn), jnp.float32)
            p1 = jnp.zeros((NB, qn), jnp.float32)
            t = 0
            for ch in range(CIN_CAT):
                for kh in range(KSIZE):
                    wgt = w_ref[(ch * KSIZE + kh) * KSIZE + kw]   # SMEM scalar
                    off = kh * W + kw + q0
                    tap = plane[ch, :, off:off + qn]              # (NB, qn) vld
                    if t % 2 == 0:                                # 2 interleaved
                        p0 = p0 + wgt * tap                       # accumulators
                    else:
                        p1 = p1 + wgt * tap
                    t += 1
            part = p0 + p1
            if lo == 0 and hi == W:                               # kw == PAD
                acc = acc + part
            else:
                mask = (wcol >= float(lo)) & (wcol < float(hi))
                acc = acc + jnp.where(mask, part, 0.0)

        # Sigmoid epilogue: exp rides the EUP slot; one divide per output vreg
        # is negligible next to the 196 VALU MAC ops per element.
        o_ref[:, q0:q0 + qn] = (1.0 / (1.0 + jnp.exp(-acc))).astype(o_ref.dtype)


def _vmem_capacity_bytes():
    """Physical VMEM per TensorCore; conservative v7x fallback if unknown."""
    try:
        info = pltpu.get_tpu_info()
        for attr in ("vmem_capacity_bytes", "vmem_size_bytes", "vmem_bytes"):
            v = getattr(info, attr, None)
            if v:
                return int(v)
    except Exception:
        pass
    return 64 * 1024 * 1024      # v7x (smallest VMEM per TC)


def _block_vmem_bytes(nb, C, H, W, in_itemsize):
    """Rough per-step VMEM use: double-buffered in/out blocks + plane scratch."""
    HW = H * W
    hw_l = _round_up(HW, 128)
    Lp = HW + 2 * (PAD * W + PAD)
    in_block = 2 * nb * _round_up(C, 8) * hw_l * in_itemsize
    plane = CIN_CAT * _round_up(nb, 8) * _round_up(Lp, 128) * 4
    out_block = 2 * _round_up(nb, 8) * hw_l * 4
    return in_block + plane + out_block


def spatial_attention(x, conv_weight):
    """x: (N, C, H, W); conv_weight: (1, 2, 7, 7) -> (N, 1, H, W) attention map."""
    N, C, H, W = x.shape
    assert conv_weight.shape == (1, CIN_CAT, KSIZE, KSIZE)
    HW = H * W

    # --- per-generation sizing: the VMEM budget (64 MiB v7x / 128 MiB v5e,v6e)
    # and a vreg budget for the conv accumulators decide how many images are
    # folded into one grid step. ----------------------------------------------
    vmem_cap = _vmem_capacity_bytes()
    vmem_limit = min(vmem_cap * 3 // 4, 96 * 1024 * 1024)
    block_budget = vmem_limit // 2

    QW = HW if HW <= 512 else 512
    q_vregs = _round_up(QW, 128) // 128
    max_groups = max(1, 48 // (5 * q_vregs))   # ~5 live (NB, QW) f32 arrays in the conv
    NB = max(1, min(N, max_groups * 8))
    itemsize = jnp.dtype(x.dtype).itemsize
    while NB > 1 and _block_vmem_bytes(NB, C, H, W, itemsize) > block_budget:
        NB -= 1
    # v7x has 2 TensorCores: keep >= 2 grid steps when splitting still leaves a
    # step large enough to amortize the ~0.35us per-step pipeline cost.
    # TODO(synk): for tiny N with very large H*W, a second parallel grid axis
    # over output-lane chunks would be the better megacore split.
    if NB == N and N > 1 and ((N + 1) // 2) * HW >= 2048:
        NB = (N + 1) // 2

    G = pl.cdiv(N, NB)
    Npad = G * NB
    if Npad != N:
        x = jnp.pad(x, ((0, Npad - N), (0, 0), (0, 0), (0, 0)))
    x2d = x.reshape(Npad, C, HW)                       # free: contiguous
    w_flat = conv_weight.reshape(-1).astype(jnp.float32)

    kernel = functools.partial(_spatial_attention_kernel, H=H, W=W, NB=NB)

    raw = pl.pallas_call(
        kernel,
        out_shape=jax.ShapeDtypeStruct((G, NB, HW), jnp.float32),
        grid=(G,),
        in_specs=[
            pl.BlockSpec((NB, C, HW), lambda b: (b, 0, 0)),
            pl.BlockSpec(memory_space=pltpu.MemorySpace.SMEM),
        ],
        out_specs=pl.BlockSpec((None, NB, HW), lambda b: (b, 0, 0)),
        scratch_shapes=[
            pltpu.VMEM((CIN_CAT, NB, HW + 2 * (PAD * W + PAD)), jnp.float32),
        ],
        compiler_params=pltpu.CompilerParams(
            dimension_semantics=("parallel",),
            vmem_limit_bytes=vmem_limit,
        ),
    )(x2d, w_flat)

    # (G, NB, HW) -> (Npad, 1, H, W): pure metadata reshape, no extra HBM pass.
    return raw.reshape(Npad, 1, H, W)[:N]


def _reference(x, conv_weight):
    avg_out = jnp.mean(x, axis=1, keepdims=True)
    max_out = jnp.max(x, axis=1, keepdims=True)
    feat = jnp.concatenate([avg_out, max_out], axis=1)
    y = jax.lax.conv_general_dilated(
        feat, conv_weight, window_strides=(1, 1),
        padding=((PAD, PAD), (PAD, PAD)),
        dimension_numbers=("NCHW", "OIHW", "NCHW"),
        precision=jax.lax.Precision.HIGHEST)
    return jax.nn.sigmoid(y)


if __name__ == "__main__":
    key = jax.random.PRNGKey(0)
    kx, kw_key, kx2, kx3 = jax.random.split(key, 4)

    # Deterministic Conv2d(2, 1, 7, padding=3, bias=False) weight init
    # (kaiming-uniform-style bound, synthetic — no checkpoint loading).
    fan_in = CIN_CAT * KSIZE * KSIZE
    bound = 1.0 / (fan_in ** 0.5)
    conv_weight = jax.random.uniform(
        kw_key, (1, CIN_CAT, KSIZE, KSIZE), dtype=jnp.float32,
        minval=-bound, maxval=bound)

    # Primary small test.
    N, C, H, W = 2, 4, 16, 16
    x = jax.random.normal(kx, (N, C, H, W), dtype=jnp.float32)
    out = jax.block_until_ready(spatial_attention(x, conv_weight))
    ref = _reference(x, conv_weight)
    assert out.shape == (N, 1, H, W)
    assert jnp.allclose(out, ref, atol=1e-5, rtol=1e-5), "mismatch vs reference"

    # Secondary test: odd N / small C.
    N2, C2 = 7, 3
    x2 = jax.random.normal(kx2, (N2, C2, H, W), dtype=jnp.float32)
    out2 = jax.block_until_ready(spatial_attention(x2, conv_weight))
    ref2 = _reference(x2, conv_weight)
    assert out2.shape == (N2, 1, H, W)
    assert jnp.allclose(out2, ref2, atol=1e-5, rtol=1e-5), "mismatch (N=7)"

    # Third test: exercises a multi-step 'parallel' grid (G=2) and batch padding.
    N3, C3 = 21, 2
    x3 = jax.random.normal(kx3, (N3, C3, H, W), dtype=jnp.float32)
    out3 = jax.block_until_ready(spatial_attention(x3, conv_weight))
    ref3 = _reference(x3, conv_weight)
    assert out3.shape == (N3, 1, H, W)
    assert jnp.allclose(out3, ref3, atol=1e-5, rtol=1e-5), "mismatch (N=21)"

    print("KERNEL_OK")
</pallas_src>

<mosaic_0001>
module attributes {stable_mosaic.version = 11 : i64} {
  func.func @_spatial_attention_kernel(%arg0: i32, %arg1: memref<2x4x256xf32, #tpu.memory_space<vmem>>, %arg2: memref<98xf32, #tpu.memory_space<smem>>, %arg3: memref<1x2x256xf32, #tpu.memory_space<vmem>>, %arg4: memref<2x2x358xf32, #tpu.memory_space<vmem>>) attributes {dimension_semantics = [#tpu.dimension_semantics<parallel>], iteration_bounds = array<i64: 1>, scalar_prefetch = 0 : i64, scratch_operands = 1 : i64, tpu.core_type = #tpu.core_type<tc>, window_params = [{transform_indices = @transform_0, window_bounds = array<i64: 2, 4, 256>}, {transform_indices = @transform_1, window_bounds = array<i64: 98>}, {transform_indices = @transform_2, window_bounds = array<i64: 1, 2, 256>}]} {
    %cst = arith.constant 0.000000e+00 : f32
    %0 = vector.broadcast %cst : f32 to vector<2x51xf32>
    %c0 = arith.constant 0 : index
    %c0_0 = arith.constant 0 : index
    %c0_1 = arith.constant 0 : index
    %1 = vector.load %arg4[%c0, %c0_0, %c0_1] : memref<2x2x358xf32, #tpu.memory_space<vmem>>, vector<1x2x51xf32>
    %2 = vector.shape_cast %1 : vector<1x2x51xf32> to vector<2x51xf32>
    %3 = vector.shape_cast %0 : vector<2x51xf32> to vector<1x2x51xf32>
    tpu.vector_store %arg4[%c0, %c0_0, %c0_1], %3 {strides = array<i32>} : memref<2x2x358xf32, #tpu.memory_space<vmem>>, vector<1x2x51xf32>,
    %cst_2 = arith.constant 0.000000e+00 : f32
    %4 = vector.broadcast %cst_2 : f32 to vector<2x51xf32>
    %c0_3 = arith.constant 0 : index
    %c0_4 = arith.constant 0 : index
    %c307 = arith.constant 307 : index
    %5 = vector.load %arg4[%c0_3, %c0_4, %c307] : memref<2x2x358xf32, #tpu.memory_space<vmem>>, vector<1x2x51xf32>
    %6 = vector.shape_cast %5 : vector<1x2x51xf32> to vector<2x51xf32>
    %7 = vector.shape_cast %4 : vector<2x51xf32> to vector<1x2x51xf32>
    tpu.vector_store %arg4[%c0_3, %c0_4, %c307], %7 {strides = array<i32>} : memref<2x2x358xf32, #tpu.memory_space<vmem>>, vector<1x2x51xf32>,
    %cst_5 = arith.constant 0.000000e+00 : f32
    %8 = vector.broadcast %cst_5 : f32 to vector<2x51xf32>
    %c1 = arith.constant 1 : index
    %c0_6 = arith.constant 0 : index
    %c0_7 = arith.constant 0 : index
    %9 = vector.load %arg4[%c1, %c0_6, %c0_7] : memref<2x2x358xf32, #tpu.memory_space<vmem>>, vector<1x2x51xf32>
    %10 = vector.shape_cast %9 : vector<1x2x51xf32> to vector<2x51xf32>
    %11 = vector.shape_cast %8 : vector<2x51xf32> to vector<1x2x51xf32>
    tpu.vector_store %arg4[%c1, %c0_6, %c0_7], %11 {strides = array<i32>} : memref<2x2x358xf32, #tpu.memory_space<vmem>>, vector<1x2x51xf32>,
    %cst_8 = arith.constant 0.000000e+00 : f32
    %12 = vector.broadcast %cst_8 : f32 to vector<2x51xf32>
    %c1_9 = arith.constant 1 : index
    %c0_10 = arith.constant 0 : index
    %c307_11 = arith.constant 307 : index
    %13 = vector.load %arg4[%c1_9, %c0_10, %c307_11] : memref<2x2x358xf32, #tpu.memory_space<vmem>>, vector<1x2x51xf32>
    %14 = vector.shape_cast %13 : vector<1x2x51xf32> to vector<2x51xf32>
    %15 = vector.shape_cast %12 : vector<2x51xf32> to vector<1x2x51xf32>
    tpu.vector_store %arg4[%c1_9, %c0_10, %c307_11], %15 {strides = array<i32>} : memref<2x2x358xf32, #tpu.memory_space<vmem>>, vector<1x2x51xf32>,
    %cst_12 = arith.constant 0.000000e+00 : f32
    %16 = vector.broadcast %cst_12 : f32 to vector<1x256xf32>
    %cst_13 = arith.constant 0xFF800000 : f32
    %17 = vector.broadcast %cst_13 : f32 to vector<1x256xf32>
    %c0_14 = arith.constant 0 : index
    %c0_15 = arith.constant 0 : index
    %c0_16 = arith.constant 0 : index
    %18 = vector.load %arg1[%c0_14, %c0_15, %c0_16] : memref<2x4x256xf32, #tpu.memory_space<vmem>>, vector<1x4x256xf32>
    %19 = vector.shape_cast %18 : vector<1x4x256xf32> to vector<4x256xf32>
    %cst_17 = arith.constant dense<0.000000e+00> : vector<256xf32>
    %20 = vector.multi_reduction <add>, %19, %cst_17 [0] : vector<4x256xf32> to vector<256xf32>
    %21 = vector.shape_cast %20 : vector<256xf32> to vector<1x256xf32>
    %22 = arith.addf %16, %21 : vector<1x256xf32>
    %cst_18 = arith.constant dense<0xFF800000> : vector<256xf32>
    %23 = vector.multi_reduction <maximumf>, %19, %cst_18 [0] : vector<4x256xf32> to vector<256xf32>
    %24 = vector.shape_cast %23 : vector<256xf32> to vector<1x256xf32>
    %25 = arith.maximumf %17, %24 : vector<1x256xf32>
    %cst_19 = arith.constant 2.500000e-01 : f32
    %26 = vector.broadcast %cst_19 : f32 to vector<1x256xf32>
    %27 = arith.mulf %22, %26 : vector<1x256xf32>
    %c0_20 = arith.constant 0 : index
    %c0_21 = arith.constant 0 : index
    %c51 = arith.constant 51 : index
    %28 = vector.load %arg4[%c0_20, %c0_21, %c51] : memref<2x2x358xf32, #tpu.memory_space<vmem>>, vector<1x1x256xf32>
    %29 = vector.shape_cast %28 : vector<1x1x256xf32> to vector<1x256xf32>
    %30 = vector.shape_cast %27 : vector<1x256xf32> to vector<1x1x256xf32>
    tpu.vector_store %arg4[%c0_20, %c0_21, %c51], %30 {strides = array<i32>} : memref<2x2x358xf32, #tpu.memory_space<vmem>>, vector<1x1x256xf32>,
    %c1_22 = arith.constant 1 : index
    %c0_23 = arith.constant 0 : index
    %c51_24 = arith.constant 51 : index
    %31 = vector.load %arg4[%c1_22, %c0_23, %c51_24] : memref<2x2x358xf32, #tpu.memory_space<vmem>>, vector<1x1x256xf32>
    %32 = vector.shape_cast %31 : vector<1x1x256xf32> to vector<1x256xf32>
    %33 = vector.shape_cast %25 : vector<1x256xf32> to vector<1x1x256xf32>
    tpu.vector_store %arg4[%c1_22, %c0_23, %c51_24], %33 {strides = array<i32>} : memref<2x2x358xf32, #tpu.memory_space<vmem>>, vector<1x1x256xf32>,
    %cst_25 = arith.constant 0.000000e+00 : f32
    %34 = vector.broadcast %cst_25 : f32 to vector<1x256xf32>
    %cst_26 = arith.constant 0xFF800000 : f32
    %35 = vector.broadcast %cst_26 : f32 to vector<1x256xf32>
    %c1_27 = arith.constant 1 : index
    %c0_28 = arith.constant 0 : index
    %c0_29 = arith.constant 0 : index
    %36 = vector.load %arg1[%c1_27, %c0_28, %c0_29] : memref<2x4x256xf32, #tpu.memory_space<vmem>>, vector<1x4x256xf32>
    %37 = vector.shape_cast %36 : vector<1x4x256xf32> to vector<4x256xf32>
    %cst_30 = arith.constant dense<0.000000e+00> : vector<256xf32>
    %38 = vector.multi_reduction <add>, %37, %cst_30 [0] : vector<4x256xf32> to vector<256xf32>
    %39 = vector.shape_cast %38 : vector<256xf32> to vector<1x256xf32>
    %40 = arith.addf %34, %39 : vector<1x256xf32>
    %cst_31 = arith.constant dense<0xFF800000> : vector<256xf32>
    %41 = vector.multi_reduction <maximumf>, %37, %cst_31 [0] : vector<4x256xf32> to vector<256xf32>
    %42 = vector.shape_cast %41 : vector<256xf32> to vector<1x256xf32>
    %43 = arith.maximumf %35, %42 : vector<1x256xf32>
    %cst_32 = arith.constant 2.500000e-01 : f32
    %44 = vector.broadcast %cst_32 : f32 to vector<1x256xf32>
    %45 = arith.mulf %40, %44 : vector<1x256xf32>
    %c0_33 = arith.constant 0 : index
    %c1_34 = arith.constant 1 : index
    %c51_35 = arith.constant 51 : index
    %46 = vector.load %arg4[%c0_33, %c1_34, %c51_35] : memref<2x2x358xf32, #tpu.memory_space<vmem>>, vector<1x1x256xf32>
    %47 = vector.shape_cast %46 : vector<1x1x256xf32> to vector<1x256xf32>
    %48 = vector.shape_cast %45 : vector<1x256xf32> to vector<1x1x256xf32>
    tpu.vector_store %arg4[%c0_33, %c1_34, %c51_35], %48 {strides = array<i32>} : memref<2x2x358xf32, #tpu.memory_space<vmem>>, vector<1x1x256xf32>,
    %c1_36 = arith.constant 1 : index
    %c1_37 = arith.constant 1 : index
    %c51_38 = arith.constant 51 : index
    %49 = vector.load %arg4[%c1_36, %c1_37, %c51_38] : memref<2x2x358xf32, #tpu.memory_space<vmem>>, vector<1x1x256xf32>
    %50 = vector.shape_cast %49 : vector<1x1x256xf32> to vector<1x256xf32>
    %51 = vector.shape_cast %43 : vector<1x256xf32> to vector<1x1x256xf32>
    tpu.vector_store %arg4[%c1_36, %c1_37, %c51_38], %51 {strides = array<i32>} : memref<2x2x358xf32, #tpu.memory_space<vmem>>, vector<1x1x256xf32>,
    %52 = tpu.iota {dimensions = array<i32: 1>} : vector<1x256xi32>
    %53 = arith.sitofp %52 : vector<1x256xi32> to vector<1x256xf32>
    %cst_39 = arith.constant 0.000000e+00 : f32
    %54 = vector.broadcast %cst_39 : f32 to vector<1x256xf32>
    %55 = arith.addf %53, %54 : vector<1x256xf32>
    %cst_40 = arith.constant 5.000000e-01 : f32
    %56 = vector.broadcast %cst_40 : f32 to vector<1x256xf32>
    %57 = arith.addf %55, %56 : vector<1x256xf32>
    %cst_41 = arith.constant 6.250000e-02 : f32
    %58 = vector.broadcast %cst_41 : f32 to vector<1x256xf32>
    %59 = arith.mulf %57, %58 : vector<1x256xf32>
    %60 = math.floor %59 : vector<1x256xf32>
    %cst_42 = arith.constant 1.600000e+01 : f32
    %61 = vector.broadcast %cst_42 : f32 to vector<1x256xf32>
    %62 = arith.mulf %60, %61 : vector<1x256xf32>
    %63 = arith.subf %55, %62 : vector<1x256xf32>
    %cst_43 = arith.constant 0.000000e+00 : f32
    %64 = vector.broadcast %cst_43 : f32 to vector<2x256xf32>
    %cst_44 = arith.constant 0.000000e+00 : f32
    %65 = vector.broadcast %cst_44 : f32 to vector<2x256xf32>
    %cst_45 = arith.constant 0.000000e+00 : f32
    %66 = vector.broadcast %cst_45 : f32 to vector<2x256xf32>
    %c0_46 = arith.constant 0 : index
    %67 = memref.load %arg2[%c0_46] : memref<98xf32, #tpu.memory_space<smem>>
    %c0_47 = arith.constant 0 : index
    %c0_48 = arith.constant 0 : index
    %c0_49 = arith.constant 0 : index
    %68 = vector.load %arg4[%c0_47, %c0_48, %c0_49] : memref<2x2x358xf32, #tpu.memory_space<vmem>>, vector<1x2x256xf32>
    %69 = vector.shape_cast %68 : vector<1x2x256xf32> to vector<2x256xf32>
    %70 = vector.broadcast %67 : f32 to vector<2x256xf32>
    %71 = arith.mulf %70, %69 : vector<2x256xf32>
    %72 = arith.addf %65, %71 : vector<2x256xf32>
    %c7 = arith.constant 7 : index
    %73 = memref.load %arg2[%c7] : memref<98xf32, #tpu.memory_space<smem>>
    %c0_50 = arith.constant 0 : index
    %c0_51 = arith.constant 0 : index
    %c16 = arith.constant 16 : index
    %74 = vector.load %arg4[%c0_50, %c0_51, %c16] : memref<2x2x358xf32, #tpu.memory_space<vmem>>, vector<1x2x256xf32>
    %75 = vector.shape_cast %74 : vector<1x2x256xf32> to vector<2x256xf32>
    %76 = vector.broadcast %73 : f32 to vector<2x256xf32>
    %77 = arith.mulf %76, %75 : vector<2x256xf32>
    %78 = arith.addf %66, %77 : vector<2x256xf32>
    %c14 = arith.constant 14 : index
    %79 = memref.load %arg2[%c14] : memref<98xf32, #tpu.memory_space<smem>>
    %c0_52 = arith.constant 0 : index
    %c0_53 = arith.constant 0 : index
    %c32 = arith.constant 32 : index
    %80 = vector.load %arg4[%c0_52, %c0_53, %c32] : memref<2x2x358xf32, #tpu.memory_space<vmem>>, vector<1x2x256xf32>
    %81 = vector.shape_cast %80 : vector<1x2x256xf32> to vector<2x256xf32>
    %82 = vector.broadcast %79 : f32 to vector<2x256xf32>
    %83 = arith.mulf %82, %81 : vector<2x256xf32>
    %84 = arith.addf %72, %83 : vector<2x256xf32>
    %c21 = arith.constant 21 : index
    %85 = memref.load %arg2[%c21] : memref<98xf32, #tpu.memory_space<smem>>
    %c0_54 = arith.constant 0 : index
    %c0_55 = arith.constant 0 : index
    %c48 = arith.constant 48 : index
    %86 = vector.load %arg4[%c0_54, %c0_55, %c48] : memref<2x2x358xf32, #tpu.memory_space<vmem>>, vector<1x2x256xf32>
    %87 = vector.shape_cast %86 : vector<1x2x256xf32> to vector<2x256xf32>
    %88 = vector.broadcast %85 : f32 to vector<2x256xf32>
    %89 = arith.mulf %88, %87 : vector<2x256xf32>
    %90 = arith.addf %78, %89 : vector<2x256xf32>
    %c28 = arith.constant 28 : index
    %91 = memref.load %arg2[%c28] : memref<98xf32, #tpu.memory_space<smem>>
    %c0_56 = arith.constant 0 : index
    %c0_57 = arith.constant 0 : index
    %c64 = arith.constant 64 : index
    %92 = vector.load %arg4[%c0_56, %c0_57, %c64] : memref<2x2x358xf32, #tpu.memory_space<vmem>>, vector<1x2x256xf32>
    %93 = vector.shape_cast %92 : vector<1x2x256xf32> to vector<2x256xf32>
    %94 = vector.broadcast %91 : f32 to vector<2x256xf32>
    %95 = arith.mulf %94, %93 : vector<2x256xf32>
    %96 = arith.addf %84, %95 : vector<2x256xf32>
    %c35 = arith.constant 35 : index
    %97 = memref.load %arg2[%c35] : memref<98xf32, #tpu.memory_space<smem>>
    %c0_58 = arith.constant 0 : index
    %c0_59 = arith.constant 0 : index
    %c80 = arith.constant 80 : index
    %98 = vector.load %arg4[%c0_58, %c0_59, %c80] : memref<2x2x358xf32, #tpu.memory_space<vmem>>, vector<1x2x256xf32>
    %99 = vector.shape_cast %98 : vector<1x2x256xf32> to vector<2x256xf32>
    %100 = vector.broadcast %97 : f32 to vector<2x256xf32>
    %101 = arith.mulf %100, %99 : vector<2x256xf32>
    %102 = arith.addf %90, %101 : vector<2x256xf32>
    %c42 = arith.constant 42 : index
    %103 = memref.load %arg2[%c42] : memref<98xf32, #tpu.memory_space<smem>>
    %c0_60 = arith.constant 0 : index
    %c0_61 = arith.constant 0 : index
    %c96 = arith.constant 96 : index
    %104 = vector.load %arg4[%c0_60, %c0_61, %c96] : memref<2x2x358xf32, #tpu.memory_space<vmem>>, vector<1x2x256xf32>
    %105 = vector.shape_cast %104 : vector<1x2x256xf32> to vector<2x256xf32>
    %106 = vector.broadcast %103 : f32 to vector<2x256xf32>
    %107 = arith.mulf %106, %105 : vector<2x256xf32>
    %108 = arith.addf %96, %107 : vector<2x256xf32>
    %c49 = arith.constant 49 : index
    %109 = memref.load %arg2[%c49] : memref<98xf32, #tpu.memory_space<smem>>
    %c1_62 = arith.constant 1 : index
    %c0_63 = arith.constant 0 : index
    %c0_64 = arith.constant 0 : index
    %110 = vector.load %arg4[%c1_62, %c0_63, %c0_64] : memref<2x2x358xf32, #tpu.memory_space<vmem>>, vector<1x2x256xf32>
    %111 = vector.shape_cast %110 : vector<1x2x256xf32> to vector<2x256xf32>
    %112 = vector.broadcast %109 : f32 to vector<2x256xf32>
    %113 = arith.mulf %112, %111 : vector<2x256xf32>
    %114 = arith.addf %102, %113 : vector<2x256xf32>
    %c56 = arith.constant 56 : index
    %115 = memref.load %arg2[%c56] : memref<98xf32, #tpu.memory_space<smem>>
    %c1_65 = arith.constant 1 : index
    %c0_66 = arith.constant 0 : index
    %c16_67 = arith.constant 16 : index
    %116 = vector.load %arg4[%c1_65, %c0_66, %c16_67] : memref<2x2x358xf32, #tpu.memory_space<vmem>>, vector<1x2x256xf32>
    %117 = vector.shape_cast %116 : vector<1x2x256xf32> to vector<2x256xf32>
    %118 = vector.broadcast %115 : f32 to vector<2x256xf32>
    %119 = arith.mulf %118, %117 : vector<2x256xf32>
    %120 = arith.addf %108, %119 : vector<2x256xf32>
    %c63 = arith.constant 63 : index
    %121 = memref.load %arg2[%c63] : memref<98xf32, #tpu.memory_space<smem>>
    %c1_68 = arith.constant 1 : index
    %c0_69 = arith.constant 0 : index
    %c32_70 = arith.constant 32 : index
    %122 = vector.load %arg4[%c1_68, %c0_69, %c32_70] : memref<2x2x358xf32, #tpu.memory_space<vmem>>, vector<1x2x256xf32>
    %123 = vector.shape_cast %122 : vector<1x2x256xf32> to vector<2x256xf32>
    %124 = vector.broadcast %121 : f32 to vector<2x256xf32>
    %125 = arith.mulf %124, %123 : vector<2x256xf32>
    %126 = arith.addf %114, %125 : vector<2x256xf32>
    %c70 = arith.constant 70 : index
    %127 = memref.load %arg2[%c70] : memref<98xf32, #tpu.memory_space<smem>>
    %c1_71 = arith.constant 1 : index
    %c0_72 = arith.constant 0 : index
    %c48_73 = arith.constant 48 : index
    %128 = vector.load %arg4[%c1_71, %c0_72, %c48_73] : memref<2x2x358xf32, #tpu.memory_space<vmem>>, vector<1x2x256xf32>
    %129 = vector.shape_cast %128 : vector<1x2x256xf32> to vector<2x256xf32>
    %130 = vector.broadcast %127 : f32 to vector<2x256xf32>
    %131 = arith.mulf %130, %129 : vector<2x256xf32>
    %132 = arith.addf %120, %131 : vector<2x256xf32>
    %c77 = arith.constant 77 : index
    %133 = memref.load %arg2[%c77] : memref<98xf32, #tpu.memory_space<smem>>
    %c1_74 = arith.constant 1 : index
    %c0_75 = arith.constant 0 : index
    %c64_76 = arith.constant 64 : index
    %134 = vector.load %arg4[%c1_74, %c0_75, %c64_76] : memref<2x2x358xf32, #tpu.memory_space<vmem>>, vector<1x2x256xf32>
    %135 = vector.shape_cast %134 : vector<1x2x256xf32> to vector<2x256xf32>
    %136 = vector.broadcast %133 : f32 to vector<2x256xf32>
    %137 = arith.mulf %136, %135 : vector<2x256xf32>
    %138 = arith.addf %126, %137 : vector<2x256xf32>
    %c84 = arith.constant 84 : index
    %139 = memref.load %arg2[%c84] : memref<98xf32, #tpu.memory_space<smem>>
    %c1_77 = arith.constant 1 : index
    %c0_78 = arith.constant 0 : index
    %c80_79 = arith.constant 80 : index
    %140 = vector.load %arg4[%c1_77, %c0_78, %c80_79] : memref<2x2x358xf32, #tpu.memory_space<vmem>>, vector<1x2x256xf32>
    %141 = vector.shape_cast %140 : vector<1x2x256xf32> to vector<2x256xf32>
    %142 = vector.broadcast %139 : f32 to vector<2x256xf32>
    %143 = arith.mulf %142, %141 : vector<2x256xf32>
    %144 = arith.addf %132, %143 : vector<2x256xf32>
    %c91 = arith.constant 91 : index
    %145 = memref.load %arg2[%c91] : memref<98xf32, #tpu.memory_space<smem>>
    %c1_80 = arith.constant 1 : index
    %c0_81 = arith.constant 0 : index
    %c96_82 = arith.constant 96 : index
    %146 = vector.load %arg4[%c1_80, %c0_81, %c96_82] : memref<2x2x358xf32, #tpu.memory_space<vmem>>, vector<1x2x256xf32>
    %147 = vector.shape_cast %146 : vector<1x2x256xf32> to vector<2x256xf32>
    %148 = vector.broadcast %145 : f32 to vector<2x256xf32>
    %149 = arith.mulf %148, %147 : vector<2x256xf32>
    %150 = arith.addf %138, %149 : vector<2x256xf32>
    %151 = arith.addf %144, %150 : vector<2x256xf32>
    %cst_83 = arith.constant 3.000000e+00 : f32
    %152 = vector.broadcast %cst_83 : f32 to vector<1x256xf32>
    %153 = arith.cmpf oge, %63, %152 : vector<1x256xf32>
    %cst_84 = arith.constant 1.600000e+01 : f32
    %154 = vector.broadcast %cst_84 : f32 to vector<1x256xf32>
    %155 = arith.cmpf olt, %63, %154 : vector<1x256xf32>
    %156 = arith.andi %153, %155 : vector<1x256xi1>
    %cst_85 = arith.constant 0.000000e+00 : f32
    %157 = vector.shape_cast %156 : vector<1x256xi1> to vector<1x256xi1>
    %158 = vector.broadcast %157 : vector<1x256xi1> to vector<2x256xi1>
    %159 = vector.broadcast %cst_85 : f32 to vector<2x256xf32>
    %160 = arith.select %158, %151, %159 : vector<2x256xi1>, vector<2x256xf32>
    %161 = arith.addf %64, %160 : vector<2x256xf32>
    %cst_86 = arith.constant 0.000000e+00 : f32
    %162 = vector.broadcast %cst_86 : f32 to vector<2x256xf32>
    %cst_87 = arith.constant 0.000000e+00 : f32
    %163 = vector.broadcast %cst_87 : f32 to vector<2x256xf32>
    %c1_88 = arith.constant 1 : index
    %164 = memref.load %arg2[%c1_88] : memref<98xf32, #tpu.memory_space<smem>>
    %c0_89 = arith.constant 0 : index
    %c0_90 = arith.constant 0 : index
    %c1_91 = arith.constant 1 : index
    %165 = vector.load %arg4[%c0_89, %c0_90, %c1_91] : memref<2x2x358xf32, #tpu.memory_space<vmem>>, vector<1x2x256xf32>
    %166 = vector.shape_cast %165 : vector<1x2x256xf32> to vector<2x256xf32>
    %167 = vector.broadcast %164 : f32 to vector<2x256xf32>
    %168 = arith.mulf %167, %166 : vector<2x256xf32>
    %169 = arith.addf %162, %168 : vector<2x256xf32>
    %c8 = arith.constant 8 : index
    %170 = memref.load %arg2[%c8] : memref<98xf32, #tpu.memory_space<smem>>
    %c0_92 = arith.constant 0 : index
    %c0_93 = arith.constant 0 : index
    %c17 = arith.constant 17 : index
    %171 = vector.load %arg4[%c0_92, %c0_93, %c17] : memref<2x2x358xf32, #tpu.memory_space<vmem>>, vector<1x2x256xf32>
    %172 = vector.shape_cast %171 : vector<1x2x256xf32> to vector<2x256xf32>
    %173 = vector.broadcast %170 : f32 to vector<2x256xf32>
    %174 = arith.mulf %173, %172 : vector<2x256xf32>
    %175 = arith.addf %163, %174 : vector<2x256xf32>
    %c15 = arith.constant 15 : index
    %176 = memref.load %arg2[%c15] : memref<98xf32, #tpu.memory_space<smem>>
    %c0_94 = arith.constant 0 : index
    %c0_95 = arith.constant 0 : index
    %c33 = arith.constant 33 : index
    %177 = vector.load %arg4[%c0_94, %c0_95, %c33] : memref<2x2x358xf32, #tpu.memory_space<vmem>>, vector<1x2x256xf32>
    %178 = vector.shape_cast %177 : vector<1x2x256xf32> to vector<2x256xf32>
    %179 = vector.broadcast %176 : f32 to vector<2x256xf32>
    %180 = arith.mulf %179, %178 : vector<2x256xf32>
    %181 = arith.addf %169, %180 : vector<2x256xf32>
    %c22 = arith.constant 22 : index
    %182 = memref.load %arg2[%c22] : memref<98xf32, #tpu.memory_space<smem>>
    %c0_96 = arith.constant 0 : index
    %c0_97 = arith.constant 0 : index
    %c49_98 = arith.constant 49 : index
    %183 = vector.load %arg4[%c0_96, %c0_97, %c49_98] : memref<2x2x358xf32, #tpu.memory_space<vmem>>, vector<1x2x256xf32>
    %184 = vector.shape_cast %183 : vector<1x2x256xf32> to vector<2x256xf32>
    %185 = vector.broadcast %182 : f32 to vector<2x256xf32>
    %186 = arith.mulf %185, %184 : vector<2x256xf32>
    %187 = arith.addf %175, %186 : vector<2x256xf32>
    %c29 = arith.constant 29 : index
    %188 = memref.load %arg2[%c29] : memref<98xf32, #tpu.memory_space<smem>>
    %c0_99 = arith.constant 0 : index
    %c0_100 = arith.constant 0 : index
    %c65 = arith.constant 65 : index
    %189 = vector.load %arg4[%c0_99, %c0_100, %c65] : memref<2x2x358xf32, #tpu.memory_space<vmem>>, vector<1x2x256xf32>
    %190 = vector.shape_cast %189 : vector<1x2x256xf32> to vector<2x256xf32>
    %191 = vector.broadcast %188 : f32 to vector<2x256xf32>
    %192 = arith.mulf %191, %190 : vector<2x256xf32>
    %193 = arith.addf %181, %192 : vector<2x256xf32>
    %c36 = arith.constant 36 : index
    %194 = memref.load %arg2[%c36] : memref<98xf32, #tpu.memory_space<smem>>
    %c0_101 = arith.constant 0 : index
    %c0_102 = arith.constant 0 : index
    %c81 = arith.constant 81 : index
    %195 = vector.load %arg4[%c0_101, %c0_102, %c81] : memref<2x2x358xf32, #tpu.memory_space<vmem>>, vector<1x2x256xf32>
    %196 = vector.shape_cast %195 : vector<1x2x256xf32> to vector<2x256xf32>
    %197 = vector.broadcast %194 : f32 to vector<2x256xf32>
    %198 = arith.mulf %197, %196 : vector<2x256xf32>
    %199 = arith.addf %187, %198 : vector<2x256xf32>
    %c43 = arith.constant 43 : index
    %200 = memref.load %arg2[%c43] : memref<98xf32, #tpu.memory_space<smem>>
    %c0_103 = arith.constant 0 : index
    %c0_104 = arith.constant 0 : index
    %c97 = arith.constant 97 : index
    %201 = vector.load %arg4[%c0_103, %c0_104, %c97] : memref<2x2x358xf32, #tpu.memory_space<vmem>>, vector<1x2x256xf32>
    %202 = vector.shape_cast %201 : vector<1x2x256xf32> to vector<2x256xf32>
    %203 = vector.broadcast %200 : f32 to vector<2x256xf32>
    %204 = arith.mulf %203, %202 : vector<2x256xf32>
    %205 = arith.addf %193, %204 : vector<2x256xf32>
    %c50 = arith.constant 50 : index
    %206 = memref.load %arg2[%c50] : memref<98xf32, #tpu.memory_space<smem>>
    %c1_105 = arith.constant 1 : index
    %c0_106 = arith.constant 0 : index
    %c1_107 = arith.constant 1 : index
    %207 = vector.load %arg4[%c1_105, %c0_106, %c1_107] : memref<2x2x358xf32, #tpu.memory_space<vmem>>, vector<1x2x256xf32>
    %208 = vector.shape_cast %207 : vector<1x2x256xf32> to vector<2x256xf32>
    %209 = vector.broadcast %206 : f32 to vector<2x256xf32>
    %210 = arith.mulf %209, %208 : vector<2x256xf32>
    %211 = arith.addf %199, %210 : vector<2x256xf32>
    %c57 = arith.constant 57 : index
    %212 = memref.load %arg2[%c57] : memref<98xf32, #tpu.memory_space<smem>>
    %c1_108 = arith.constant 1 : index
    %c0_109 = arith.constant 0 : index
    %c17_110 = arith.constant 17 : index
    %213 = vector.load %arg4[%c1_108, %c0_109, %c17_110] : memref<2x2x358xf32, #tpu.memory_space<vmem>>, vector<1x2x256xf32>
    %214 = vector.shape_cast %213 : vector<1x2x256xf32> to vector<2x256xf32>
    %215 = vector.broadcast %212 : f32 to vector<2x256xf32>
    %216 = arith.mulf %215, %214 : vector<2x256xf32>
    %217 = arith.addf %205, %216 : vector<2x256xf32>
    %c64_111 = arith.constant 64 : index
    %218 = memref.load %arg2[%c64_111] : memref<98xf32, #tpu.memory_space<smem>>
    %c1_112 = arith.constant 1 : index
    %c0_113 = arith.constant 0 : index
    %c33_114 = arith.constant 33 : index
    %219 = vector.load %arg4[%c1_112, %c0_113, %c33_114] : memref<2x2x358xf32, #tpu.memory_space<vmem>>, vector<1x2x256xf32>
    %220 = vector.shape_cast %219 : vector<1x2x256xf32> to vector<2x256xf32>
    %221 = vector.broadcast %218 : f32 to vector<2x256xf32>
    %222 = arith.mulf %221, %220 : vector<2x256xf32>
    %223 = arith.addf %211, %222 : vector<2x256xf32>
    %c71 = arith.constant 71 : index
    %224 = memref.load %arg2[%c71] : memref<98xf32, #tpu.memory_space<smem>>
    %c1_115 = arith.constant 1 : index
    %c0_116 = arith.constant 0 : index
    %c49_117 = arith.constant 49 : index
    %225 = vector.load %arg4[%c1_115, %c0_116, %c49_117] : memref<2x2x358xf32, #tpu.memory_space<vmem>>, vector<1x2x256xf32>
    %226 = vector.shape_cast %225 : vector<1x2x256xf32> to vector<2x256xf32>
    %227 = vector.broadcast %224 : f32 to vector<2x256xf32>
    %228 = arith.mulf %227, %226 : vector<2x256xf32>
    %229 = arith.addf %217, %228 : vector<2x256xf32>
    %c78 = arith.constant 78 : index
    %230 = memref.load %arg2[%c78] : memref<98xf32, #tpu.memory_space<smem>>
    %c1_118 = arith.constant 1 : index
    %c0_119 = arith.constant 0 : index
    %c65_120 = arith.constant 65 : index
    %231 = vector.load %arg4[%c1_118, %c0_119, %c65_120] : memref<2x2x358xf32, #tpu.memory_space<vmem>>, vector<1x2x256xf32>
    %232 = vector.shape_cast %231 : vector<1x2x256xf32> to vector<2x256xf32>
    %233 = vector.broadcast %230 : f32 to vector<2x256xf32>
    %234 = arith.mulf %233, %232 : vector<2x256xf32>
    %235 = arith.addf %223, %234 : vector<2x256xf32>
    %c85 = arith.constant 85 : index
    %236 = memref.load %arg2[%c85] : memref<98xf32, #tpu.memory_space<smem>>
    %c1_121 = arith.constant 1 : index
    %c0_122 = arith.constant 0 : index
    %c81_123 = arith.constant 81 : index
    %237 = vector.load %arg4[%c1_121, %c0_122, %c81_123] : memref<2x2x358xf32, #tpu.memory_space<vmem>>, vector<1x2x256xf32>
    %238 = vector.shape_cast %237 : vector<1x2x256xf32> to vector<2x256xf32>
    %239 = vector.broadcast %236 : f32 to vector<2x256xf32>
    %240 = arith.mulf %239, %238 : vector<2x256xf32>
    %241 = arith.addf %229, %240 : vector<2x256xf32>
    %c92 = arith.constant 92 : index
    %242 = memref.load %arg2[%c92] : memref<98xf32, #tpu.memory_space<smem>>
    %c1_124 = arith.constant 1 : index
    %c0_125 = arith.constant 0 : index
    %c97_126 = arith.constant 97 : index
    %243 = vector.load %arg4[%c1_124, %c0_125, %c97_126] : memref<2x2x358xf32, #tpu.memory_space<vmem>>, vector<1x2x256xf32>
    %244 = vector.shape_cast %243 : vector<1x2x256xf32> to vector<2x256xf32>
    %245 = vector.broadcast %242 : f32 to vector<2x256xf32>
    %246 = arith.mulf %245, %244 : vector<2x256xf32>
    %247 = arith.addf %235, %246 : vector<2x256xf32>
    %248 = arith.addf %241, %247 : vector<2x256xf32>
    %cst_127 = arith.constant 2.000000e+00 : f32
    %249 = vector.broadcast %cst_127 : f32 to vector<1x256xf32>
    %250 = arith.cmpf oge, %63, %249 : vector<1x256xf32>
    %cst_128 = arith.constant 1.600000e+01 : f32
    %251 = vector.broadcast %cst_128 : f32 to vector<1x256xf32>
    %252 = arith.cmpf olt, %63, %251 : vector<1x256xf32>
    %253 = arith.andi %250, %252 : vector<1x256xi1>
    %cst_129 = arith.constant 0.000000e+00 : f32
    %254 = vector.shape_cast %253 : vector<1x256xi1> to vector<1x256xi1>
    %255 = vector.broadcast %254 : vector<1x256xi1> to vector<2x256xi1>
    %256 = vector.broadcast %cst_129 : f32 to vector<2x256xf32>
    %257 = arith.select %255, %248, %256 : vector<2x256xi1>, vector<2x256xf32>
    %258 = arith.addf %161, %257 : vector<2x256xf32>
    %cst_130 = arith.constant 0.000000e+00 : f32
    %259 = vector.broadcast %cst_130 : f32 to vector<2x256xf32>
    %cst_131 = arith.constant 0.000000e+00 : f32
    %260 = vector.broadcast %cst_131 : f32 to vector<2x256xf32>
    %c2 = arith.constant 2 : index
    %261 = memref.load %arg2[%c2] : memref<98xf32, #tpu.memory_space<smem>>
    %c0_132 = arith.constant 0 : index
    %c0_133 = arith.constant 0 : index
    %c2_134 = arith.constant 2 : index
    %262 = vector.load %arg4[%c0_132, %c0_133, %c2_134] : memref<2x2x358xf32, #tpu.memory_space<vmem>>, vector<1x2x256xf32>
    %263 = vector.shape_cast %262 : vector<1x2x256xf32> to vector<2x256xf32>
    %264 = vector.broadcast %261 : f32 to vector<2x256xf32>
    %265 = arith.mulf %264, %263 : vector<2x256xf32>
    %266 = arith.addf %259, %265 : vector<2x256xf32>
    %c9 = arith.constant 9 : index
    %267 = memref.load %arg2[%c9] : memref<98xf32, #tpu.memory_space<smem>>
    %c0_135 = arith.constant 0 : index
    %c0_136 = arith.constant 0 : index
    %c18 = arith.constant 18 : index
    %268 = vector.load %arg4[%c0_135, %c0_136, %c18] : memref<2x2x358xf32, #tpu.memory_space<vmem>>, vector<1x2x256xf32>
    %269 = vector.shape_cast %268 : vector<1x2x256xf32> to vector<2x256xf32>
    %270 = vector.broadcast %267 : f32 to vector<2x256xf32>
    %271 = arith.mulf %270, %269 : vector<2x256xf32>
    %272 = arith.addf %260, %271 : vector<2x256xf32>
    %c16_137 = arith.constant 16 : index
    %273 = memref.load %arg2[%c16_137] : memref<98xf32, #tpu.memory_space<smem>>
    %c0_138 = arith.constant 0 : index
    %c0_139 = arith.constant 0 : index
    %c34 = arith.constant 34 : index
    %274 = vector.load %arg4[%c0_138, %c0_139, %c34] : memref<2x2x358xf32, #tpu.memory_space<vmem>>, vector<1x2x256xf32>
    %275 = vector.shape_cast %274 : vector<1x2x256xf32> to vector<2x256xf32>
    %276 = vector.broadcast %273 : f32 to vector<2x256xf32>
    %277 = arith.mulf %276, %275 : vector<2x256xf32>
    %278 = arith.addf %266, %277 : vector<2x256xf32>
    %c23 = arith.constant 23 : index
    %279 = memref.load %arg2[%c23] : memref<98xf32, #tpu.memory_space<smem>>
    %c0_140 = arith.constant 0 : index
    %c0_141 = arith.constant 0 : index
    %c50_142 = arith.constant 50 : index
    %280 = vector.load %arg4[%c0_140, %c0_141, %c50_142] : memref<2x2x358xf32, #tpu.memory_space<vmem>>, vector<1x2x256xf32>
    %281 = vector.shape_cast %280 : vector<1x2x256xf32> to vector<2x256xf32>
    %282 = vector.broadcast %279 : f32 to vector<2x256xf32>
    %283 = arith.mulf %282, %281 : vector<2x256xf32>
    %284 = arith.addf %272, %283 : vector<2x256xf32>
    %c30 = arith.constant 30 : index
    %285 = memref.load %arg2[%c30] : memref<98xf32, #tpu.memory_space<smem>>
    %c0_143 = arith.constant 0 : index
    %c0_144 = arith.constant 0 : index
    %c66 = arith.constant 66 : index
    %286 = vector.load %arg4[%c0_143, %c0_144, %c66] : memref<2x2x358xf32, #tpu.memory_space<vmem>>, vector<1x2x256xf32>
    %287 = vector.shape_cast %286 : vector<1x2x256xf32> to vector<2x256xf32>
    %288 = vector.broadcast %285 : f32 to vector<2x256xf32>
    %289 = arith.mulf %288, %287 : vector<2x256xf32>
    %290 = arith.addf %278, %289 : vector<2x256xf32>
    %c37 = arith.constant 37 : index
    %291 = memref.load %arg2[%c37] : memref<98xf32, #tpu.memory_space<smem>>
    %c0_145 = arith.constant 0 : index
    %c0_146 = arith.constant 0 : index
    %c82 = arith.constant 82 : index
    %292 = vector.load %arg4[%c0_145, %c0_146, %c82] : memref<2x2x358xf32, #tpu.memory_space<vmem>>, vector<1x2x256xf32>
    %293 = vector.shape_cast %292 : vector<1x2x256xf32> to vector<2x256xf32>
    %294 = vector.broadcast %291 : f32 to vector<2x256xf32>
    %295 = arith.mulf %294, %293 : vector<2x256xf32>
    %296 = arith.addf %284, %295 : vector<2x256xf32>
    %c44 = arith.constant 44 : index
    %297 = memref.load %arg2[%c44] : memref<98xf32, #tpu.memory_space<smem>>
    %c0_147 = arith.constant 0 : index
    %c0_148 = arith.constant 0 : index
    %c98 = arith.constant 98 : index
    %298 = vector.load %arg4[%c0_147, %c0_148, %c98] : memref<2x2x358xf32, #tpu.memory_space<vmem>>, vector<1x2x256xf32>
    %299 = vector.shape_cast %298 : vector<1x2x256xf32> to vector<2x256xf32>
    %300 = vector.broadcast %297 : f32 to vector<2x256xf32>
    %301 = arith.mulf %300, %299 : vector<2x256xf32>
    %302 = arith.addf %290, %301 : vector<2x256xf32>
    %c51_149 = arith.constant 51 : index
    %303 = memref.load %arg2[%c51_149] : memref<98xf32, #tpu.memory_space<smem>>
    %c1_150 = arith.constant 1 : index
    %c0_151 = arith.constant 0 : index
    %c2_152 = arith.constant 2 : index
    %304 = vector.load %arg4[%c1_150, %c0_151, %c2_152] : memref<2x2x358xf32, #tpu.memory_space<vmem>>, vector<1x2x256xf32>
    %305 = vector.shape_cast %304 : vector<1x2x256xf32> to vector<2x256xf32>
    %306 = vector.broadcast %303 : f32 to vector<2x256xf32>
    %307 = arith.mulf %306, %305 : vector<2x256xf32>
    %308 = arith.addf %296, %307 : vector<2x256xf32>
    %c58 = arith.constant 58 : index
    %309 = memref.load %arg2[%c58] : memref<98xf32, #tpu.memory_space<smem>>
    %c1_153 = arith.constant 1 : index
    %c0_154 = arith.constant 0 : index
    %c18_155 = arith.constant 18 : index
    %310 = vector.load %arg4[%c1_153, %c0_154, %c18_155] : memref<2x2x358xf32, #tpu.memory_space<vmem>>, vector<1x2x256xf32>
    %311 = vector.shape_cast %310 : vector<1x2x256xf32> to vector<2x256xf32>
    %312 = vector.broadcast %309 : f32 to vector<2x256xf32>
    %313 = arith.mulf %312, %311 : vector<2x256xf32>
    %314 = arith.addf %302, %313 : vector<2x256xf32>
    %c65_156 = arith.constant 65 : index
    %315 = memref.load %arg2[%c65_156] : memref<98xf32, #tpu.memory_space<smem>>
    %c1_157 = arith.constant 1 : index
    %c0_158 = arith.constant 0 : index
    %c34_159 = arith.constant 34 : index
    %316 = vector.load %arg4[%c1_157, %c0_158, %c34_159] : memref<2x2x358xf32, #tpu.memory_space<vmem>>, vector<1x2x256xf32>
    %317 = vector.shape_cast %316 : vector<1x2x256xf32> to vector<2x256xf32>
    %318 = vector.broadcast %315 : f32 to vector<2x256xf32>
    %319 = arith.mulf %318, %317 : vector<2x256xf32>
    %320 = arith.addf %308, %319 : vector<2x256xf32>
    %c72 = arith.constant 72 : index
    %321 = memref.load %arg2[%c72] : memref<98xf32, #tpu.memory_space<smem>>
    %c1_160 = arith.constant 1 : index
    %c0_161 = arith.constant 0 : index
    %c50_162 = arith.constant 50 : index
    %322 = vector.load %arg4[%c1_160, %c0_161, %c50_162] : memref<2x2x358xf32, #tpu.memory_space<vmem>>, vector<1x2x256xf32>
    %323 = vector.shape_cast %322 : vector<1x2x256xf32> to vector<2x256xf32>
    %324 = vector.broadcast %321 : f32 to vector<2x256xf32>
    %325 = arith.mulf %324, %323 : vector<2x256xf32>
    %326 = arith.addf %314, %325 : vector<2x256xf32>
    %c79 = arith.constant 79 : index
    %327 = memref.load %arg2[%c79] : memref<98xf32, #tpu.memory_space<smem>>
    %c1_163 = arith.constant 1 : index
    %c0_164 = arith.constant 0 : index
    %c66_165 = arith.constant 66 : index
    %328 = vector.load %arg4[%c1_163, %c0_164, %c66_165] : memref<2x2x358xf32, #tpu.memory_space<vmem>>, vector<1x2x256xf32>
    %329 = vector.shape_cast %328 : vector<1x2x256xf32> to vector<2x256xf32>
    %330 = vector.broadcast %327 : f32 to vector<2x256xf32>
    %331 = arith.mulf %330, %329 : vector<2x256xf32>
    %332 = arith.addf %320, %331 : vector<2x256xf32>
    %c86 = arith.constant 86 : index
    %333 = memref.load %arg2[%c86] : memref<98xf32, #tpu.memory_space<smem>>
    %c1_166 = arith.constant 1 : index
    %c0_167 = arith.constant 0 : index
    %c82_168 = arith.constant 82 : index
    %334 = vector.load %arg4[%c1_166, %c0_167, %c82_168] : memref<2x2x358xf32, #tpu.memory_space<vmem>>, vector<1x2x256xf32>
    %335 = vector.shape_cast %334 : vector<1x2x256xf32> to vector<2x256xf32>
    %336 = vector.broadcast %333 : f32 to vector<2x256xf32>
    %337 = arith.mulf %336, %335 : vector<2x256xf32>
    %338 = arith.addf %326, %337 : vector<2x256xf32>
    %c93 = arith.constant 93 : index
    %339 = memref.load %arg2[%c93] : memref<98xf32, #tpu.memory_space<smem>>
    %c1_169 = arith.constant 1 : index
    %c0_170 = arith.constant 0 : index
    %c98_171 = arith.constant 98 : index
    %340 = vector.load %arg4[%c1_169, %c0_170, %c98_171] : memref<2x2x358xf32, #tpu.memory_space<vmem>>, vector<1x2x256xf32>
    %341 = vector.shape_cast %340 : vector<1x2x256xf32> to vector<2x256xf32>
    %342 = vector.broadcast %339 : f32 to vector<2x256xf32>
    %343 = arith.mulf %342, %341 : vector<2x256xf32>
    %344 = arith.addf %332, %343 : vector<2x256xf32>
    %345 = arith.addf %338, %344 : vector<2x256xf32>
    %cst_172 = arith.constant 1.000000e+00 : f32
    %346 = vector.broadcast %cst_172 : f32 to vector<1x256xf32>
    %347 = arith.cmpf oge, %63, %346 : vector<1x256xf32>
    %cst_173 = arith.constant 1.600000e+01 : f32
    %348 = vector.broadcast %cst_173 : f32 to vector<1x256xf32>
    %349 = arith.cmpf olt, %63, %348 : vector<1x256xf32>
    %350 = arith.andi %347, %349 : vector<1x256xi1>
    %cst_174 = arith.constant 0.000000e+00 : f32
    %351 = vector.shape_cast %350 : vector<1x256xi1> to vector<1x256xi1>
    %352 = vector.broadcast %351 : vector<1x256xi1> to vector<2x256xi1>
    %353 = vector.broadcast %cst_174 : f32 to vector<2x256xf32>
    %354 = arith.select %352, %345, %353 : vector<2x256xi1>, vector<2x256xf32>
    %355 = arith.addf %258, %354 : vector<2x256xf32>
    %cst_175 = arith.constant 0.000000e+00 : f32
    %356 = vector.broadcast %cst_175 : f32 to vector<2x256xf32>
    %cst_176 = arith.constant 0.000000e+00 : f32
    %357 = vector.broadcast %cst_176 : f32 to vector<2x256xf32>
    %c3 = arith.constant 3 : index
    %358 = memref.load %arg2[%c3] : memref<98xf32, #tpu.memory_space<smem>>
    %c0_177 = arith.constant 0 : index
    %c0_178 = arith.constant 0 : index
    %c3_179 = arith.constant 3 : index
    %359 = vector.load %arg4[%c0_177, %c0_178, %c3_179] : memref<2x2x358xf32, #tpu.memory_space<vmem>>, vector<1x2x256xf32>
    %360 = vector.shape_cast %359 : vector<1x2x256xf32> to vector<2x256xf32>
    %361 = vector.broadcast %358 : f32 to vector<2x256xf32>
    %362 = arith.mulf %361, %360 : vector<2x256xf32>
    %363 = arith.addf %356, %362 : vector<2x256xf32>
    %c10 = arith.constant 10 : index
    %364 = memref.load %arg2[%c10] : memref<98xf32, #tpu.memory_space<smem>>
    %c0_180 = arith.constant 0 : index
    %c0_181 = arith.constant 0 : index
    %c19 = arith.constant 19 : index
    %365 = vector.load %arg4[%c0_180, %c0_181, %c19] : memref<2x2x358xf32, #tpu.memory_space<vmem>>, vector<1x2x256xf32>
    %366 = vector.shape_cast %365 : vector<1x2x256xf32> to vector<2x256xf32>
    %367 = vector.broadcast %364 : f32 to vector<2x256xf32>
    %368 = arith.mulf %367, %366 : vector<2x256xf32>
    %369 = arith.addf %357, %368 : vector<2x256xf32>
    %c17_182 = arith.constant 17 : index
    %370 = memref.load %arg2[%c17_182] : memref<98xf32, #tpu.memory_space<smem>>
    %c0_183 = arith.constant 0 : index
    %c0_184 = arith.constant 0 : index
    %c35_185 = arith.constant 35 : index
    %371 = vector.load %arg4[%c0_183, %c0_184, %c35_185] : memref<2x2x358xf32, #tpu.memory_space<vmem>>, vector<1x2x256xf32>
    %372 = vector.shape_cast %371 : vector<1x2x256xf32> to vector<2x256xf32>
    %373 = vector.broadcast %370 : f32 to vector<2x256xf32>
    %374 = arith.mulf %373, %372 : vector<2x256xf32>
    %375 = arith.addf %363, %374 : vector<2x256xf32>
    %c24 = arith.constant 24 : index
    %376 = memref.load %arg2[%c24] : memref<98xf32, #tpu.memory_space<smem>>
    %c0_186 = arith.constant 0 : index
    %c0_187 = arith.constant 0 : index
    %c51_188 = arith.constant 51 : index
    %377 = vector.load %arg4[%c0_186, %c0_187, %c51_188] : memref<2x2x358xf32, #tpu.memory_space<vmem>>, vector<1x2x256xf32>
    %378 = vector.shape_cast %377 : vector<1x2x256xf32> to vector<2x256xf32>
    %379 = vector.broadcast %376 : f32 to vector<2x256xf32>
    %380 = arith.mulf %379, %378 : vector<2x256xf32>
    %381 = arith.addf %369, %380 : vector<2x256xf32>
    %c31 = arith.constant 31 : index
    %382 = memref.load %arg2[%c31] : memref<98xf32, #tpu.memory_space<smem>>
    %c0_189 = arith.constant 0 : index
    %c0_190 = arith.constant 0 : index
    %c67 = arith.constant 67 : index
    %383 = vector.load %arg4[%c0_189, %c0_190, %c67] : memref<2x2x358xf32, #tpu.memory_space<vmem>>, vector<1x2x256xf32>
    %384 = vector.shape_cast %383 : vector<1x2x256xf32> to vector<2x256xf32>
    %385 = vector.broadcast %382 : f32 to vector<2x256xf32>
    %386 = arith.mulf %385, %384 : vector<2x256xf32>
    %387 = arith.addf %375, %386 : vector<2x256xf32>
    %c38 = arith.constant 38 : index
    %388 = memref.load %arg2[%c38] : memref<98xf32, #tpu.memory_space<smem>>
    %c0_191 = arith.constant 0 : index
    %c0_192 = arith.constant 0 : index
    %c83 = arith.constant 83 : index
    %389 = vector.load %arg4[%c0_191, %c0_192, %c83] : memref<2x2x358xf32, #tpu.memory_space<vmem>>, vector<1x2x256xf32>
    %390 = vector.shape_cast %389 : vector<1x2x256xf32> to vector<2x256xf32>
    %391 = vector.broadcast %388 : f32 to vector<2x256xf32>
    %392 = arith.mulf %391, %390 : vector<2x256xf32>
    %393 = arith.addf %381, %392 : vector<2x256xf32>
    %c45 = arith.constant 45 : index
    %394 = memref.load %arg2[%c45] : memref<98xf32, #tpu.memory_space<smem>>
    %c0_193 = arith.constant 0 : index
    %c0_194 = arith.constant 0 : index
    %c99 = arith.constant 99 : index
    %395 = vector.load %arg4[%c0_193, %c0_194, %c99] : memref<2x2x358xf32, #tpu.memory_space<vmem>>, vector<1x2x256xf32>
    %396 = vector.shape_cast %395 : vector<1x2x256xf32> to vector<2x256xf32>
    %397 = vector.broadcast %394 : f32 to vector<2x256xf32>
    %398 = arith.mulf %397, %396 : vector<2x256xf32>
    %399 = arith.addf %387, %398 : vector<2x256xf32>
    %c52 = arith.constant 52 : index
    %400 = memref.load %arg2[%c52] : memref<98xf32, #tpu.memory_space<smem>>
    %c1_195 = arith.constant 1 : index
    %c0_196 = arith.constant 0 : index
    %c3_197 = arith.constant 3 : index
    %401 = vector.load %arg4[%c1_195, %c0_196, %c3_197] : memref<2x2x358xf32, #tpu.memory_space<vmem>>, vector<1x2x256xf32>
    %402 = vector.shape_cast %401 : vector<1x2x256xf32> to vector<2x256xf32>
    %403 = vector.broadcast %400 : f32 to vector<2x256xf32>
    %404 = arith.mulf %403, %402 : vector<2x256xf32>
    %405 = arith.addf %393, %404 : vector<2x256xf32>
    %c59 = arith.constant 59 : index
    %406 = memref.load %arg2[%c59] : memref<98xf32, #tpu.memory_space<smem>>
    %c1_198 = arith.constant 1 : index
    %c0_199 = arith.constant 0 : index
    %c19_200 = arith.constant 19 : index
    %407 = vector.load %arg4[%c1_198, %c0_199, %c19_200] : memref<2x2x358xf32, #tpu.memory_space<vmem>>, vector<1x2x256xf32>
    %408 = vector.shape_cast %407 : vector<1x2x256xf32> to vector<2x256xf32>
    %409 = vector.broadcast %406 : f32 to vector<2x256xf32>
    %410 = arith.mulf %409, %408 : vector<2x256xf32>
    %411 = arith.addf %399, %410 : vector<2x256xf32>
    %c66_201 = arith.constant 66 : index
    %412 = memref.load %arg2[%c66_201] : memref<98xf32, #tpu.memory_space<smem>>
    %c1_202 = arith.constant 1 : index
    %c0_203 = arith.constant 0 : index
    %c35_204 = arith.constant 35 : index
    %413 = vector.load %arg4[%c1_202, %c0_203, %c35_204] : memref<2x2x358xf32, #tpu.memory_space<vmem>>, vector<1x2x256xf32>
    %414 = vector.shape_cast %413 : vector<1x2x256xf32> to vector<2x256xf32>
    %415 = vector.broadcast %412 : f32 to vector<2x256xf32>
    %416 = arith.mulf %415, %414 : vector<2x256xf32>
    %417 = arith.addf %405, %416 : vector<2x256xf32>
    %c73 = arith.constant 73 : index
    %418 = memref.load %arg2[%c73] : memref<98xf32, #tpu.memory_space<smem>>
    %c1_205 = arith.constant 1 : index
    %c0_206 = arith.constant 0 : index
    %c51_207 = arith.constant 51 : index
    %419 = vector.load %arg4[%c1_205, %c0_206, %c51_207] : memref<2x2x358xf32, #tpu.memory_space<vmem>>, vector<1x2x256xf32>
    %420 = vector.shape_cast %419 : vector<1x2x256xf32> to vector<2x256xf32>
    %421 = vector.broadcast %418 : f32 to vector<2x256xf32>
    %422 = arith.mulf %421, %420 : vector<2x256xf32>
    %423 = arith.addf %411, %422 : vector<2x256xf32>
    %c80_208 = arith.constant 80 : index
    %424 = memref.load %arg2[%c80_208] : memref<98xf32, #tpu.memory_space<smem>>
    %c1_209 = arith.constant 1 : index
    %c0_210 = arith.constant 0 : index
    %c67_211 = arith.constant 67 : index
    %425 = vector.load %arg4[%c1_209, %c0_210, %c67_211] : memref<2x2x358xf32, #tpu.memory_space<vmem>>, vector<1x2x256xf32>
    %426 = vector.shape_cast %425 : vector<1x2x256xf32> to vector<2x256xf32>
    %427 = vector.broadcast %424 : f32 to vector<2x256xf32>
    %428 = arith.mulf %427, %426 : vector<2x256xf32>
    %429 = arith.addf %417, %428 : vector<2x256xf32>
    %c87 = arith.constant 87 : index
    %430 = memref.load %arg2[%c87] : memref<98xf32, #tpu.memory_space<smem>>
    %c1_212 = arith.constant 1 : index
    %c0_213 = arith.constant 0 : index
    %c83_214 = arith.constant 83 : index
    %431 = vector.load %arg4[%c1_212, %c0_213, %c83_214] : memref<2x2x358xf32, #tpu.memory_space<vmem>>, vector<1x2x256xf32>
    %432 = vector.shape_cast %431 : vector<1x2x256xf32> to vector<2x256xf32>
    %433 = vector.broadcast %430 : f32 to vector<2x256xf32>
    %434 = arith.mulf %433, %432 : vector<2x256xf32>
    %435 = arith.addf %423, %434 : vector<2x256xf32>
    %c94 = arith.constant 94 : index
    %436 = memref.load %arg2[%c94] : memref<98xf32, #tpu.memory_space<smem>>
    %c1_215 = arith.constant 1 : index
    %c0_216 = arith.constant 0 : index
    %c99_217 = arith.constant 99 : index
    %437 = vector.load %arg4[%c1_215, %c0_216, %c99_217] : memref<2x2x358xf32, #tpu.memory_space<vmem>>, vector<1x2x256xf32>
    %438 = vector.shape_cast %437 : vector<1x2x256xf32> to vector<2x256xf32>
    %439 = vector.broadcast %436 : f32 to vector<2x256xf32>
    %440 = arith.mulf %439, %438 : vector<2x256xf32>
    %441 = arith.addf %429, %440 : vector<2x256xf32>
    %442 = arith.addf %435, %441 : vector<2x256xf32>
    %443 = arith.addf %355, %442 : vector<2x256xf32>
    %cst_218 = arith.constant 0.000000e+00 : f32
    %444 = vector.broadcast %cst_218 : f32 to vector<2x256xf32>
    %cst_219 = arith.constant 0.000000e+00 : f32
    %445 = vector.broadcast %cst_219 : f32 to vector<2x256xf32>
    %c4 = arith.constant 4 : index
    %446 = memref.load %arg2[%c4] : memref<98xf32, #tpu.memory_space<smem>>
    %c0_220 = arith.constant 0 : index
    %c0_221 = arith.constant 0 : index
    %c4_222 = arith.constant 4 : index
    %447 = vector.load %arg4[%c0_220, %c0_221, %c4_222] : memref<2x2x358xf32, #tpu.memory_space<vmem>>, vector<1x2x256xf32>
    %448 = vector.shape_cast %447 : vector<1x2x256xf32> to vector<2x256xf32>
    %449 = vector.broadcast %446 : f32 to vector<2x256xf32>
    %450 = arith.mulf %449, %448 : vector<2x256xf32>
    %451 = arith.addf %444, %450 : vector<2x256xf32>
    %c11 = arith.constant 11 : index
    %452 = memref.load %arg2[%c11] : memref<98xf32, #tpu.memory_space<smem>>
    %c0_223 = arith.constant 0 : index
    %c0_224 = arith.constant 0 : index
    %c20 = arith.constant 20 : index
    %453 = vector.load %arg4[%c0_223, %c0_224, %c20] : memref<2x2x358xf32, #tpu.memory_space<vmem>>, vector<1x2x256xf32>
    %454 = vector.shape_cast %453 : vector<1x2x256xf32> to vector<2x256xf32>
    %455 = vector.broadcast %452 : f32 to vector<2x256xf32>
    %456 = arith.mulf %455, %454 : vector<2x256xf32>
    %457 = arith.addf %445, %456 : vector<2x256xf32>
    %c18_225 = arith.constant 18 : index
    %458 = memref.load %arg2[%c18_225] : memref<98xf32, #tpu.memory_space<smem>>
    %c0_226 = arith.constant 0 : index
    %c0_227 = arith.constant 0 : index
    %c36_228 = arith.constant 36 : index
    %459 = vector.load %arg4[%c0_226, %c0_227, %c36_228] : memref<2x2x358xf32, #tpu.memory_space<vmem>>, vector<1x2x256xf32>
    %460 = vector.shape_cast %459 : vector<1x2x256xf32> to vector<2x256xf32>
    %461 = vector.broadcast %458 : f32 to vector<2x256xf32>
    %462 = arith.mulf %461, %460 : vector<2x256xf32>
    %463 = arith.addf %451, %462 : vector<2x256xf32>
    %c25 = arith.constant 25 : index
    %464 = memref.load %arg2[%c25] : memref<98xf32, #tpu.memory_space<smem>>
    %c0_229 = arith.constant 0 : index
    %c0_230 = arith.constant 0 : index
    %c52_231 = arith.constant 52 : index
    %465 = vector.load %arg4[%c0_229, %c0_230, %c52_231] : memref<2x2x358xf32, #tpu.memory_space<vmem>>, vector<1x2x256xf32>
    %466 = vector.shape_cast %465 : vector<1x2x256xf32> to vector<2x256xf32>
    %467 = vector.broadcast %464 : f32 to vector<2x256xf32>
    %468 = arith.mulf %467, %466 : vector<2x256xf32>
    %469 = arith.addf %457, %468 : vector<2x256xf32>
    %c32_232 = arith.constant 32 : index
    %470 = memref.load %arg2[%c32_232] : memref<98xf32, #tpu.memory_space<smem>>
    %c0_233 = arith.constant 0 : index
    %c0_234 = arith.constant 0 : index
    %c68 = arith.constant 68 : index
    %471 = vector.load %arg4[%c0_233, %c0_234, %c68] : memref<2x2x358xf32, #tpu.memory_space<vmem>>, vector<1x2x256xf32>
    %472 = vector.shape_cast %471 : vector<1x2x256xf32> to vector<2x256xf32>
    %473 = vector.broadcast %470 : f32 to vector<2x256xf32>
    %474 = arith.mulf %473, %472 : vector<2x256xf32>
    %475 = arith.addf %463, %474 : vector<2x256xf32>
    %c39 = arith.constant 39 : index
    %476 = memref.load %arg2[%c39] : memref<98xf32, #tpu.memory_space<smem>>
    %c0_235 = arith.constant 0 : index
    %c0_236 = arith.constant 0 : index
    %c84_237 = arith.constant 84 : index
    %477 = vector.load %arg4[%c0_235, %c0_236, %c84_237] : memref<2x2x358xf32, #tpu.memory_space<vmem>>, vector<1x2x256xf32>
    %478 = vector.shape_cast %477 : vector<1x2x256xf32> to vector<2x256xf32>
    %479 = vector.broadcast %476 : f32 to vector<2x256xf32>
    %480 = arith.mulf %479, %478 : vector<2x256xf32>
    %481 = arith.addf %469, %480 : vector<2x256xf32>
    %c46 = arith.constant 46 : index
    %482 = memref.load %arg2[%c46] : memref<98xf32, #tpu.memory_space<smem>>
    %c0_238 = arith.constant 0 : index
    %c0_239 = arith.constant 0 : index
    %c100 = arith.constant 100 : index
    %483 = vector.load %arg4[%c0_238, %c0_239, %c100] : memref<2x2x358xf32, #tpu.memory_space<vmem>>, vector<1x2x256xf32>
    %484 = vector.shape_cast %483 : vector<1x2x256xf32> to vector<2x256xf32>
    %485 = vector.broadcast %482 : f32 to vector<2x256xf32>
    %486 = arith.mulf %485, %484 : vector<2x256xf32>
    %487 = arith.addf %475, %486 : vector<2x256xf32>
    %c53 = arith.constant 53 : index
    %488 = memref.load %arg2[%c53] : memref<98xf32, #tpu.memory_space<smem>>
    %c1_240 = arith.constant 1 : index
    %c0_241 = arith.constant 0 : index
    %c4_242 = arith.constant 4 : index
    %489 = vector.load %arg4[%c1_240, %c0_241, %c4_242] : memref<2x2x358xf32, #tpu.memory_space<vmem>>, vector<1x2x256xf32>
    %490 = vector.shape_cast %489 : vector<1x2x256xf32> to vector<2x256xf32>
    %491 = vector.broadcast %488 : f32 to vector<2x256xf32>
    %492 = arith.mulf %491, %490 : vector<2x256xf32>
    %493 = arith.addf %481, %492 : vector<2x256xf32>
    %c60 = arith.constant 60 : index
    %494 = memref.load %arg2[%c60] : memref<98xf32, #tpu.memory_space<smem>>
    %c1_243 = arith.constant 1 : index
    %c0_244 = arith.constant 0 : index
    %c20_245 = arith.constant 20 : index
    %495 = vector.load %arg4[%c1_243, %c0_244, %c20_245] : memref<2x2x358xf32, #tpu.memory_space<vmem>>, vector<1x2x256xf32>
    %496 = vector.shape_cast %495 : vector<1x2x256xf32> to vector<2x256xf32>
    %497 = vector.broadcast %494 : f32 to vector<2x256xf32>
    %498 = arith.mulf %497, %496 : vector<2x256xf32>
    %499 = arith.addf %487, %498 : vector<2x256xf32>
    %c67_246 = arith.constant 67 : index
    %500 = memref.load %arg2[%c67_246] : memref<98xf32, #tpu.memory_space<smem>>
    %c1_247 = arith.constant 1 : index
    %c0_248 = arith.constant 0 : index
    %c36_249 = arith.constant 36 : index
    %501 = vector.load %arg4[%c1_247, %c0_248, %c36_249] : memref<2x2x358xf32, #tpu.memory_space<vmem>>, vector<1x2x256xf32>
    %502 = vector.shape_cast %501 : vector<1x2x256xf32> to vector<2x256xf32>
    %503 = vector.broadcast %500 : f32 to vector<2x256xf32>
    %504 = arith.mulf %503, %502 : vector<2x256xf32>
    %505 = arith.addf %493, %504 : vector<2x256xf32>
    %c74 = arith.constant 74 : index
    %506 = memref.load %arg2[%c74] : memref<98xf32, #tpu.memory_space<smem>>
    %c1_250 = arith.constant 1 : index
    %c0_251 = arith.constant 0 : index
    %c52_252 = arith.constant 52 : index
    %507 = vector.load %arg4[%c1_250, %c0_251, %c52_252] : memref<2x2x358xf32, #tpu.memory_space<vmem>>, vector<1x2x256xf32>
    %508 = vector.shape_cast %507 : vector<1x2x256xf32> to vector<2x256xf32>
    %509 = vector.broadcast %506 : f32 to vector<2x256xf32>
    %510 = arith.mulf %509, %508 : vector<2x256xf32>
    %511 = arith.addf %499, %510 : vector<2x256xf32>
    %c81_253 = arith.constant 81 : index
    %512 = memref.load %arg2[%c81_253] : memref<98xf32, #tpu.memory_space<smem>>
    %c1_254 = arith.constant 1 : index
    %c0_255 = arith.constant 0 : index
    %c68_256 = arith.constant 68 : index
    %513 = vector.load %arg4[%c1_254, %c0_255, %c68_256] : memref<2x2x358xf32, #tpu.memory_space<vmem>>, vector<1x2x256xf32>
    %514 = vector.shape_cast %513 : vector<1x2x256xf32> to vector<2x256xf32>
    %515 = vector.broadcast %512 : f32 to vector<2x256xf32>
    %516 = arith.mulf %515, %514 : vector<2x256xf32>
    %517 = arith.addf %505, %516 : vector<2x256xf32>
    %c88 = arith.constant 88 : index
    %518 = memref.load %arg2[%c88] : memref<98xf32, #tpu.memory_space<smem>>
    %c1_257 = arith.constant 1 : index
    %c0_258 = arith.constant 0 : index
    %c84_259 = arith.constant 84 : index
    %519 = vector.load %arg4[%c1_257, %c0_258, %c84_259] : memref<2x2x358xf32, #tpu.memory_space<vmem>>, vector<1x2x256xf32>
    %520 = vector.shape_cast %519 : vector<1x2x256xf32> to vector<2x256xf32>
    %521 = vector.broadcast %518 : f32 to vector<2x256xf32>
    %522 = arith.mulf %521, %520 : vector<2x256xf32>
    %523 = arith.addf %511, %522 : vector<2x256xf32>
    %c95 = arith.constant 95 : index
    %524 = memref.load %arg2[%c95] : memref<98xf32, #tpu.memory_space<smem>>
    %c1_260 = arith.constant 1 : index
    %c0_261 = arith.constant 0 : index
    %c100_262 = arith.constant 100 : index
    %525 = vector.load %arg4[%c1_260, %c0_261, %c100_262] : memref<2x2x358xf32, #tpu.memory_space<vmem>>, vector<1x2x256xf32>
    %526 = vector.shape_cast %525 : vector<1x2x256xf32> to vector<2x256xf32>
    %527 = vector.broadcast %524 : f32 to vector<2x256xf32>
    %528 = arith.mulf %527, %526 : vector<2x256xf32>
    %529 = arith.addf %517, %528 : vector<2x256xf32>
    %530 = arith.addf %523, %529 : vector<2x256xf32>
    %cst_263 = arith.constant 0.000000e+00 : f32
    %531 = vector.broadcast %cst_263 : f32 to vector<1x256xf32>
    %532 = arith.cmpf oge, %63, %531 : vector<1x256xf32>
    %cst_264 = arith.constant 1.500000e+01 : f32
    %533 = vector.broadcast %cst_264 : f32 to vector<1x256xf32>
    %534 = arith.cmpf olt, %63, %533 : vector<1x256xf32>
    %535 = arith.andi %532, %534 : vector<1x256xi1>
    %cst_265 = arith.constant 0.000000e+00 : f32
    %536 = vector.shape_cast %535 : vector<1x256xi1> to vector<1x256xi1>
    %537 = vector.broadcast %536 : vector<1x256xi1> to vector<2x256xi1>
    %538 = vector.broadcast %cst_265 : f32 to vector<2x256xf32>
    %539 = arith.select %537, %530, %538 : vector<2x256xi1>, vector<2x256xf32>
    %540 = arith.addf %443, %539 : vector<2x256xf32>
    %cst_266 = arith.constant 0.000000e+00 : f32
    %541 = vector.broadcast %cst_266 : f32 to vector<2x256xf32>
    %cst_267 = arith.constant 0.000000e+00 : f32
    %542 = vector.broadcast %cst_267 : f32 to vector<2x256xf32>
    %c5 = arith.constant 5 : index
    %543 = memref.load %arg2[%c5] : memref<98xf32, #tpu.memory_space<smem>>
    %c0_268 = arith.constant 0 : index
    %c0_269 = arith.constant 0 : index
    %c5_270 = arith.constant 5 : index
    %544 = vector.load %arg4[%c0_268, %c0_269, %c5_270] : memref<2x2x358xf32, #tpu.memory_space<vmem>>, vector<1x2x256xf32>
    %545 = vector.shape_cast %544 : vector<1x2x256xf32> to vector<2x256xf32>
    %546 = vector.broadcast %543 : f32 to vector<2x256xf32>
    %547 = arith.mulf %546, %545 : vector<2x256xf32>
    %548 = arith.addf %541, %547 : vector<2x256xf32>
    %c12 = arith.constant 12 : index
    %549 = memref.load %arg2[%c12] : memref<98xf32, #tpu.memory_space<smem>>
    %c0_271 = arith.constant 0 : index
    %c0_272 = arith.constant 0 : index
    %c21_273 = arith.constant 21 : index
    %550 = vector.load %arg4[%c0_271, %c0_272, %c21_273] : memref<2x2x358xf32, #tpu.memory_space<vmem>>, vector<1x2x256xf32>
    %551 = vector.shape_cast %550 : vector<1x2x256xf32> to vector<2x256xf32>
    %552 = vector.broadcast %549 : f32 to vector<2x256xf32>
    %553 = arith.mulf %552, %551 : vector<2x256xf32>
    %554 = arith.addf %542, %553 : vector<2x256xf32>
    %c19_274 = arith.constant 19 : index
    %555 = memref.load %arg2[%c19_274] : memref<98xf32, #tpu.memory_space<smem>>
    %c0_275 = arith.constant 0 : index
    %c0_276 = arith.constant 0 : index
    %c37_277 = arith.constant 37 : index
    %556 = vector.load %arg4[%c0_275, %c0_276, %c37_277] : memref<2x2x358xf32, #tpu.memory_space<vmem>>, vector<1x2x256xf32>
    %557 = vector.shape_cast %556 : vector<1x2x256xf32> to vector<2x256xf32>
    %558 = vector.broadcast %555 : f32 to vector<2x256xf32>
    %559 = arith.mulf %558, %557 : vector<2x256xf32>
    %560 = arith.addf %548, %559 : vector<2x256xf32>
    %c26 = arith.constant 26 : index
    %561 = memref.load %arg2[%c26] : memref<98xf32, #tpu.memory_space<smem>>
    %c0_278 = arith.constant 0 : index
    %c0_279 = arith.constant 0 : index
    %c53_280 = arith.constant 53 : index
    %562 = vector.load %arg4[%c0_278, %c0_279, %c53_280] : memref<2x2x358xf32, #tpu.memory_space<vmem>>, vector<1x2x256xf32>
    %563 = vector.shape_cast %562 : vector<1x2x256xf32> to vector<2x256xf32>
    %564 = vector.broadcast %561 : f32 to vector<2x256xf32>
    %565 = arith.mulf %564, %563 : vector<2x256xf32>
    %566 = arith.addf %554, %565 : vector<2x256xf32>
    %c33_281 = arith.constant 33 : index
    %567 = memref.load %arg2[%c33_281] : memref<98xf32, #tpu.memory_space<smem>>
    %c0_282 = arith.constant 0 : index
    %c0_283 = arith.constant 0 : index
    %c69 = arith.constant 69 : index
    %568 = vector.load %arg4[%c0_282, %c0_283, %c69] : memref<2x2x358xf32, #tpu.memory_space<vmem>>, vector<1x2x256xf32>
    %569 = vector.shape_cast %568 : vector<1x2x256xf32> to vector<2x256xf32>
    %570 = vector.broadcast %567 : f32 to vector<2x256xf32>
    %571 = arith.mulf %570, %569 : vector<2x256xf32>
    %572 = arith.addf %560, %571 : vector<2x256xf32>
    %c40 = arith.constant 40 : index
    %573 = memref.load %arg2[%c40] : memref<98xf32, #tpu.memory_space<smem>>
    %c0_284 = arith.constant 0 : index
    %c0_285 = arith.constant 0 : index
    %c85_286 = arith.constant 85 : index
    %574 = vector.load %arg4[%c0_284, %c0_285, %c85_286] : memref<2x2x358xf32, #tpu.memory_space<vmem>>, vector<1x2x256xf32>
    %575 = vector.shape_cast %574 : vector<1x2x256xf32> to vector<2x256xf32>
    %576 = vector.broadcast %573 : f32 to vector<2x256xf32>
    %577 = arith.mulf %576, %575 : vector<2x256xf32>
    %578 = arith.addf %566, %577 : vector<2x256xf32>
    %c47 = arith.constant 47 : index
    %579 = memref.load %arg2[%c47] : memref<98xf32, #tpu.memory_space<smem>>
    %c0_287 = arith.constant 0 : index
    %c0_288 = arith.constant 0 : index
    %c101 = arith.constant 101 : index
    %580 = vector.load %arg4[%c0_287, %c0_288, %c101] : memref<2x2x358xf32, #tpu.memory_space<vmem>>, vector<1x2x256xf32>
    %581 = vector.shape_cast %580 : vector<1x2x256xf32> to vector<2x256xf32>
    %582 = vector.broadcast %579 : f32 to vector<2x256xf32>
    %583 = arith.mulf %582, %581 : vector<2x256xf32>
    %584 = arith.addf %572, %583 : vector<2x256xf32>
    %c54 = arith.constant 54 : index
    %585 = memref.load %arg2[%c54] : memref<98xf32, #tpu.memory_space<smem>>
    %c1_289 = arith.constant 1 : index
    %c0_290 = arith.constant 0 : index
    %c5_291 = arith.constant 5 : index
    %586 = vector.load %arg4[%c1_289, %c0_290, %c5_291] : memref<2x2x358xf32, #tpu.memory_space<vmem>>, vector<1x2x256xf32>
    %587 = vector.shape_cast %586 : vector<1x2x256xf32> to vector<2x256xf32>
    %588 = vector.broadcast %585 : f32 to vector<2x256xf32>
    %589 = arith.mulf %588, %587 : vector<2x256xf32>
    %590 = arith.addf %578, %589 : vector<2x256xf32>
    %c61 = arith.constant 61 : index
    %591 = memref.load %arg2[%c61] : memref<98xf32, #tpu.memory_space<smem>>
    %c1_292 = arith.constant 1 : index
    %c0_293 = arith.constant 0 : index
    %c21_294 = arith.constant 21 : index
    %592 = vector.load %arg4[%c1_292, %c0_293, %c21_294] : memref<2x2x358xf32, #tpu.memory_space<vmem>>, vector<1x2x256xf32>
    %593 = vector.shape_cast %592 : vector<1x2x256xf32> to vector<2x256xf32>
    %594 = vector.broadcast %591 : f32 to vector<2x256xf32>
    %595 = arith.mulf %594, %593 : vector<2x256xf32>
    %596 = arith.addf %584, %595 : vector<2x256xf32>
    %c68_295 = arith.constant 68 : index
    %597 = memref.load %arg2[%c68_295] : memref<98xf32, #tpu.memory_space<smem>>
    %c1_296 = arith.constant 1 : index
    %c0_297 = arith.constant 0 : index
    %c37_298 = arith.constant 37 : index
    %598 = vector.load %arg4[%c1_296, %c0_297, %c37_298] : memref<2x2x358xf32, #tpu.memory_space<vmem>>, vector<1x2x256xf32>
    %599 = vector.shape_cast %598 : vector<1x2x256xf32> to vector<2x256xf32>
    %600 = vector.broadcast %597 : f32 to vector<2x256xf32>
    %601 = arith.mulf %600, %599 : vector<2x256xf32>
    %602 = arith.addf %590, %601 : vector<2x256xf32>
    %c75 = arith.constant 75 : index
    %603 = memref.load %arg2[%c75] : memref<98xf32, #tpu.memory_space<smem>>
    %c1_299 = arith.constant 1 : index
    %c0_300 = arith.constant 0 : index
    %c53_301 = arith.constant 53 : index
    %604 = vector.load %arg4[%c1_299, %c0_300, %c53_301] : memref<2x2x358xf32, #tpu.memory_space<vmem>>, vector<1x2x256xf32>
    %605 = vector.shape_cast %604 : vector<1x2x256xf32> to vector<2x256xf32>
    %606 = vector.broadcast %603 : f32 to vector<2x256xf32>
    %607 = arith.mulf %606, %605 : vector<2x256xf32>
    %608 = arith.addf %596, %607 : vector<2x256xf32>
    %c82_302 = arith.constant 82 : index
    %609 = memref.load %arg2[%c82_302] : memref<98xf32, #tpu.memory_space<smem>>
    %c1_303 = arith.constant 1 : index
    %c0_304 = arith.constant 0 : index
    %c69_305 = arith.constant 69 : index
    %610 = vector.load %arg4[%c1_303, %c0_304, %c69_305] : memref<2x2x358xf32, #tpu.memory_space<vmem>>, vector<1x2x256xf32>
    %611 = vector.shape_cast %610 : vector<1x2x256xf32> to vector<2x256xf32>
    %612 = vector.broadcast %609 : f32 to vector<2x256xf32>
    %613 = arith.mulf %612, %611 : vector<2x256xf32>
    %614 = arith.addf %602, %613 : vector<2x256xf32>
    %c89 = arith.constant 89 : index
    %615 = memref.load %arg2[%c89] : memref<98xf32, #tpu.memory_space<smem>>
    %c1_306 = arith.constant 1 : index
    %c0_307 = arith.constant 0 : index
    %c85_308 = arith.constant 85 : index
    %616 = vector.load %arg4[%c1_306, %c0_307, %c85_308] : memref<2x2x358xf32, #tpu.memory_space<vmem>>, vector<1x2x256xf32>
    %617 = vector.shape_cast %616 : vector<1x2x256xf32> to vector<2x256xf32>
    %618 = vector.broadcast %615 : f32 to vector<2x256xf32>
    %619 = arith.mulf %618, %617 : vector<2x256xf32>
    %620 = arith.addf %608, %619 : vector<2x256xf32>
    %c96_309 = arith.constant 96 : index
    %621 = memref.load %arg2[%c96_309] : memref<98xf32, #tpu.memory_space<smem>>
    %c1_310 = arith.constant 1 : index
    %c0_311 = arith.constant 0 : index
    %c101_312 = arith.constant 101 : index
    %622 = vector.load %arg4[%c1_310, %c0_311, %c101_312] : memref<2x2x358xf32, #tpu.memory_space<vmem>>, vector<1x2x256xf32>
    %623 = vector.shape_cast %622 : vector<1x2x256xf32> to vector<2x256xf32>
    %624 = vector.broadcast %621 : f32 to vector<2x256xf32>
    %625 = arith.mulf %624, %623 : vector<2x256xf32>
    %626 = arith.addf %614, %625 : vector<2x256xf32>
    %627 = arith.addf %620, %626 : vector<2x256xf32>
    %cst_313 = arith.constant 0.000000e+00 : f32
    %628 = vector.broadcast %cst_313 : f32 to vector<1x256xf32>
    %629 = arith.cmpf oge, %63, %628 : vector<1x256xf32>
    %cst_314 = arith.constant 1.400000e+01 : f32
    %630 = vector.broadcast %cst_314 : f32 to vector<1x256xf32>
    %631 = arith.cmpf olt, %63, %630 : vector<1x256xf32>
    %632 = arith.andi %629, %631 : vector<1x256xi1>
    %cst_315 = arith.constant 0.000000e+00 : f32
    %633 = vector.shape_cast %632 : vector<1x256xi1> to vector<1x256xi1>
    %634 = vector.broadcast %633 : vector<1x256xi1> to vector<2x256xi1>
    %635 = vector.broadcast %cst_315 : f32 to vector<2x256xf32>
    %636 = arith.select %634, %627, %635 : vector<2x256xi1>, vector<2x256xf32>
    %637 = arith.addf %540, %636 : vector<2x256xf32>
    %cst_316 = arith.constant 0.000000e+00 : f32
    %638 = vector.broadcast %cst_316 : f32 to vector<2x256xf32>
    %cst_317 = arith.constant 0.000000e+00 : f32
    %639 = vector.broadcast %cst_317 : f32 to vector<2x256xf32>
    %c6 = arith.constant 6 : index
    %640 = memref.load %arg2[%c6] : memref<98xf32, #tpu.memory_space<smem>>
    %c0_318 = arith.constant 0 : index
    %c0_319 = arith.constant 0 : index
    %c6_320 = arith.constant 6 : index
    %641 = vector.load %arg4[%c0_318, %c0_319, %c6_320] : memref<2x2x358xf32, #tpu.memory_space<vmem>>, vector<1x2x256xf32>
    %642 = vector.shape_cast %641 : vector<1x2x256xf32> to vector<2x256xf32>
    %643 = vector.broadcast %640 : f32 to vector<2x256xf32>
    %644 = arith.mulf %643, %642 : vector<2x256xf32>
    %645 = arith.addf %638, %644 : vector<2x256xf32>
    %c13 = arith.constant 13 : index
    %646 = memref.load %arg2[%c13] : memref<98xf32, #tpu.memory_space<smem>>
    %c0_321 = arith.constant 0 : index
    %c0_322 = arith.constant 0 : index
    %c22_323 = arith.constant 22 : index
    %647 = vector.load %arg4[%c0_321, %c0_322, %c22_323] : memref<2x2x358xf32, #tpu.memory_space<vmem>>, vector<1x2x256xf32>
    %648 = vector.shape_cast %647 : vector<1x2x256xf32> to vector<2x256xf32>
    %649 = vector.broadcast %646 : f32 to vector<2x256xf32>
    %650 = arith.mulf %649, %648 : vector<2x256xf32>
    %651 = arith.addf %639, %650 : vector<2x256xf32>
    %c20_324 = arith.constant 20 : index
    %652 = memref.load %arg2[%c20_324] : memref<98xf32, #tpu.memory_space<smem>>
    %c0_325 = arith.constant 0 : index
    %c0_326 = arith.constant 0 : index
    %c38_327 = arith.constant 38 : index
    %653 = vector.load %arg4[%c0_325, %c0_326, %c38_327] : memref<2x2x358xf32, #tpu.memory_space<vmem>>, vector<1x2x256xf32>
    %654 = vector.shape_cast %653 : vector<1x2x256xf32> to vector<2x256xf32>
    %655 = vector.broadcast %652 : f32 to vector<2x256xf32>
    %656 = arith.mulf %655, %654 : vector<2x256xf32>
    %657 = arith.addf %645, %656 : vector<2x256xf32>
    %c27 = arith.constant 27 : index
    %658 = memref.load %arg2[%c27] : memref<98xf32, #tpu.memory_space<smem>>
    %c0_328 = arith.constant 0 : index
    %c0_329 = arith.constant 0 : index
    %c54_330 = arith.constant 54 : index
    %659 = vector.load %arg4[%c0_328, %c0_329, %c54_330] : memref<2x2x358xf32, #tpu.memory_space<vmem>>, vector<1x2x256xf32>
    %660 = vector.shape_cast %659 : vector<1x2x256xf32> to vector<2x256xf32>
    %661 = vector.broadcast %658 : f32 to vector<2x256xf32>
    %662 = arith.mulf %661, %660 : vector<2x256xf32>
    %663 = arith.addf %651, %662 : vector<2x256xf32>
    %c34_331 = arith.constant 34 : index
    %664 = memref.load %arg2[%c34_331] : memref<98xf32, #tpu.memory_space<smem>>
    %c0_332 = arith.constant 0 : index
    %c0_333 = arith.constant 0 : index
    %c70_334 = arith.constant 70 : index
    %665 = vector.load %arg4[%c0_332, %c0_333, %c70_334] : memref<2x2x358xf32, #tpu.memory_space<vmem>>, vector<1x2x256xf32>
    %666 = vector.shape_cast %665 : vector<1x2x256xf32> to vector<2x256xf32>
    %667 = vector.broadcast %664 : f32 to vector<2x256xf32>
    %668 = arith.mulf %667, %666 : vector<2x256xf32>
    %669 = arith.addf %657, %668 : vector<2x256xf32>
    %c41 = arith.constant 41 : index
    %670 = memref.load %arg2[%c41] : memref<98xf32, #tpu.memory_space<smem>>
    %c0_335 = arith.constant 0 : index
    %c0_336 = arith.constant 0 : index
    %c86_337 = arith.constant 86 : index
    %671 = vector.load %arg4[%c0_335, %c0_336, %c86_337] : memref<2x2x358xf32, #tpu.memory_space<vmem>>, vector<1x2x256xf32>
    %672 = vector.shape_cast %671 : vector<1x2x256xf32> to vector<2x256xf32>
    %673 = vector.broadcast %670 : f32 to vector<2x256xf32>
    %674 = arith.mulf %673, %672 : vector<2x256xf32>
    %675 = arith.addf %663, %674 : vector<2x256xf32>
    %c48_338 = arith.constant 48 : index
    %676 = memref.load %arg2[%c48_338] : memref<98xf32, #tpu.memory_space<smem>>
    %c0_339 = arith.constant 0 : index
    %c0_340 = arith.constant 0 : index
    %c102 = arith.constant 102 : index
    %677 = vector.load %arg4[%c0_339, %c0_340, %c102] : memref<2x2x358xf32, #tpu.memory_space<vmem>>, vector<1x2x256xf32>
    %678 = vector.shape_cast %677 : vector<1x2x256xf32> to vector<2x256xf32>
    %679 = vector.broadcast %676 : f32 to vector<2x256xf32>
    %680 = arith.mulf %679, %678 : vector<2x256xf32>
    %681 = arith.addf %669, %680 : vector<2x256xf32>
    %c55 = arith.constant 55 : index
    %682 = memref.load %arg2[%c55] : memref<98xf32, #tpu.memory_space<smem>>
    %c1_341 = arith.constant 1 : index
    %c0_342 = arith.constant 0 : index
    %c6_343 = arith.constant 6 : index
    %683 = vector.load %arg4[%c1_341, %c0_342, %c6_343] : memref<2x2x358xf32, #tpu.memory_space<vmem>>, vector<1x2x256xf32>
    %684 = vector.shape_cast %683 : vector<1x2x256xf32> to vector<2x256xf32>
    %685 = vector.broadcast %682 : f32 to vector<2x256xf32>
    %686 = arith.mulf %685, %684 : vector<2x256xf32>
    %687 = arith.addf %675, %686 : vector<2x256xf32>
    %c62 = arith.constant 62 : index
    %688 = memref.load %arg2[%c62] : memref<98xf32, #tpu.memory_space<smem>>
    %c1_344 = arith.constant 1 : index
    %c0_345 = arith.constant 0 : index
    %c22_346 = arith.constant 22 : index
    %689 = vector.load %arg4[%c1_344, %c0_345, %c22_346] : memref<2x2x358xf32, #tpu.memory_space<vmem>>, vector<1x2x256xf32>
    %690 = vector.shape_cast %689 : vector<1x2x256xf32> to vector<2x256xf32>
    %691 = vector.broadcast %688 : f32 to vector<2x256xf32>
    %692 = arith.mulf %691, %690 : vector<2x256xf32>
    %693 = arith.addf %681, %692 : vector<2x256xf32>
    %c69_347 = arith.constant 69 : index
    %694 = memref.load %arg2[%c69_347] : memref<98xf32, #tpu.memory_space<smem>>
    %c1_348 = arith.constant 1 : index
    %c0_349 = arith.constant 0 : index
    %c38_350 = arith.constant 38 : index
    %695 = vector.load %arg4[%c1_348, %c0_349, %c38_350] : memref<2x2x358xf32, #tpu.memory_space<vmem>>, vector<1x2x256xf32>
    %696 = vector.shape_cast %695 : vector<1x2x256xf32> to vector<2x256xf32>
    %697 = vector.broadcast %694 : f32 to vector<2x256xf32>
    %698 = arith.mulf %697, %696 : vector<2x256xf32>
    %699 = arith.addf %687, %698 : vector<2x256xf32>
    %c76 = arith.constant 76 : index
    %700 = memref.load %arg2[%c76] : memref<98xf32, #tpu.memory_space<smem>>
    %c1_351 = arith.constant 1 : index
    %c0_352 = arith.constant 0 : index
    %c54_353 = arith.constant 54 : index
    %701 = vector.load %arg4[%c1_351, %c0_352, %c54_353] : memref<2x2x358xf32, #tpu.memory_space<vmem>>, vector<1x2x256xf32>
    %702 = vector.shape_cast %701 : vector<1x2x256xf32> to vector<2x256xf32>
    %703 = vector.broadcast %700 : f32 to vector<2x256xf32>
    %704 = arith.mulf %703, %702 : vector<2x256xf32>
    %705 = arith.addf %693, %704 : vector<2x256xf32>
    %c83_354 = arith.constant 83 : index
    %706 = memref.load %arg2[%c83_354] : memref<98xf32, #tpu.memory_space<smem>>
    %c1_355 = arith.constant 1 : index
    %c0_356 = arith.constant 0 : index
    %c70_357 = arith.constant 70 : index
    %707 = vector.load %arg4[%c1_355, %c0_356, %c70_357] : memref<2x2x358xf32, #tpu.memory_space<vmem>>, vector<1x2x256xf32>
    %708 = vector.shape_cast %707 : vector<1x2x256xf32> to vector<2x256xf32>
    %709 = vector.broadcast %706 : f32 to vector<2x256xf32>
    %710 = arith.mulf %709, %708 : vector<2x256xf32>
    %711 = arith.addf %699, %710 : vector<2x256xf32>
    %c90 = arith.constant 90 : index
    %712 = memref.load %arg2[%c90] : memref<98xf32, #tpu.memory_space<smem>>
    %c1_358 = arith.constant 1 : index
    %c0_359 = arith.constant 0 : index
    %c86_360 = arith.constant 86 : index
    %713 = vector.load %arg4[%c1_358, %c0_359, %c86_360] : memref<2x2x358xf32, #tpu.memory_space<vmem>>, vector<1x2x256xf32>
    %714 = vector.shape_cast %713 : vector<1x2x256xf32> to vector<2x256xf32>
    %715 = vector.broadcast %712 : f32 to vector<2x256xf32>
    %716 = arith.mulf %715, %714 : vector<2x256xf32>
    %717 = arith.addf %705, %716 : vector<2x256xf32>
    %c97_361 = arith.constant 97 : index
    %718 = memref.load %arg2[%c97_361] : memref<98xf32, #tpu.memory_space<smem>>
    %c1_362 = arith.constant 1 : index
    %c0_363 = arith.constant 0 : index
    %c102_364 = arith.constant 102 : index
    %719 = vector.load %arg4[%c1_362, %c0_363, %c102_364] : memref<2x2x358xf32, #tpu.memory_space<vmem>>, vector<1x2x256xf32>
    %720 = vector.shape_cast %719 : vector<1x2x256xf32> to vector<2x256xf32>
    %721 = vector.broadcast %718 : f32 to vector<2x256xf32>
    %722 = arith.mulf %721, %720 : vector<2x256xf32>
    %723 = arith.addf %711, %722 : vector<2x256xf32>
    %724 = arith.addf %717, %723 : vector<2x256xf32>
    %cst_365 = arith.constant 0.000000e+00 : f32
    %725 = vector.broadcast %cst_365 : f32 to vector<1x256xf32>
    %726 = arith.cmpf oge, %63, %725 : vector<1x256xf32>
    %cst_366 = arith.constant 1.300000e+01 : f32
    %727 = vector.broadcast %cst_366 : f32 to vector<1x256xf32>
    %728 = arith.cmpf olt, %63, %727 : vector<1x256xf32>
    %729 = arith.andi %726, %728 : vector<1x256xi1>
    %cst_367 = arith.constant 0.000000e+00 : f32
    %730 = vector.shape_cast %729 : vector<1x256xi1> to vector<1x256xi1>
    %731 = vector.broadcast %730 : vector<1x256xi1> to vector<2x256xi1>
    %732 = vector.broadcast %cst_367 : f32 to vector<2x256xf32>
    %733 = arith.select %731, %724, %732 : vector<2x256xi1>, vector<2x256xf32>
    %734 = arith.addf %637, %733 : vector<2x256xf32>
    %cst_368 = arith.constant 0.000000e+00 : f32
    %735 = vector.broadcast %cst_368 : f32 to vector<2x256xf32>
    %736 = arith.subf %735, %734 : vector<2x256xf32>
    %737 = math.exp %736 : vector<2x256xf32>
    %cst_369 = arith.constant 1.000000e+00 : f32
    %738 = vector.broadcast %cst_369 : f32 to vector<2x256xf32>
    %739 = arith.addf %738, %737 : vector<2x256xf32>
    %cst_370 = arith.constant 1.000000e+00 : f32
    %740 = vector.broadcast %cst_370 : f32 to vector<2x256xf32>
    %741 = arith.divf %740, %739 : vector<2x256xf32>
    %c0_371 = arith.constant 0 : index
    %c0_372 = arith.constant 0 : index
    %c0_373 = arith.constant 0 : index
    %742 = vector.load %arg3[%c0_371, %c0_372, %c0_373] : memref<1x2x256xf32, #tpu.memory_space<vmem>>, vector<1x2x256xf32>
    %743 = vector.shape_cast %742 : vector<1x2x256xf32> to vector<2x256xf32>
    %744 = vector.shape_cast %741 : vector<2x256xf32> to vector<1x2x256xf32>
    tpu.vector_store %arg3[%c0_371, %c0_372, %c0_373], %744 {strides = array<i32>} : memref<1x2x256xf32, #tpu.memory_space<vmem>>, vector<1x2x256xf32>,
    return
  }
  func.func @transform_0(%arg0: i32) -> (i32, i32, i32) {
    %c0_i32 = arith.constant 0 : i32
    %c0_i32_0 = arith.constant 0 : i32
    %c0_i32_1 = arith.constant 0 : i32
    return %arg0, %c0_i32, %c0_i32_0 : i32, i32, i32
  }
  func.func @transform_1(%arg0: i32) -> i32 {
    %c0_i32 = arith.constant 0 : i32
    %c0_i32_0 = arith.constant 0 : i32
    return %c0_i32 : i32
  }
  func.func @transform_2(%arg0: i32) -> (i32, i32, i32) {
    %c0_i32 = arith.constant 0 : i32
    %c0_i32_0 = arith.constant 0 : i32
    %c0_i32_1 = arith.constant 0 : i32
    return %arg0, %c0_i32, %c0_i32_0 : i32, i32, i32
  }
}

</mosaic_0001>

<llo_original>
// kernel: tpu_custom_call.1
$region0: #{tpu_custom_call.1}
  #allocation0 [shape = 'u32[]', space=smem, size = 0x4, offset = 0x4, fixed_abs, tag = 'smem constant byte address 0x4 - core index']
  #allocation1 [shape = 'u32[72,128]{1,0:T(1,128)}', space=vmem, size = 0x9000, scoped, tag = 'internal scratch']
  #allocation2 [shape = 'f32[2,2,358]{2,1,0:T(2,128)}', space=vmem, size = 0x1800, scoped, tag = 'scratch operand']
  %s0 = inlined_call_operand.hbm [shape: f32[2,4,256], index: 0, kind: input, shape index: {}]
  %s1 = inlined_call_operand.hbm [shape: f32[98], index: 1, kind: input, shape index: {}]
  %s2 = inlined_call_operand.hbm [shape: f32[1,2,256], index: 2, kind: output, shape index: {}]
  %s3 = sld [smem:[#allocation0]]
  $region26: #{tpu_custom_call.1} parent=0
    _
  %s5 = ssub.s32 1, %s3
  %s6 = scalar_select 0, %s5, %s3
  $region1: #{tpu_custom_call.1} parent=0
    #allocation3 [shape = 'u8[8192]{0}', space=vmem, size = 0x2000, scoped, tag = 'input window, operand 0, single buffered']
    #allocation4 [shape = 's32[1]{0}', space=sflag, size = 0x4, scoped, tag = 'scoped memory for tpu_custom_call.1']
    #allocation5 [shape = 's32[1]{0}', space=sflag, size = 0x4, scoped, tag = 'scoped memory for tpu_custom_call.1']
    #allocation6 [shape = 's32[1]{0}', space=sflag, size = 0x4, scoped, tag = 'scoped memory for tpu_custom_call.1']
    #allocation7 [shape = 'u8[512]{0}', space=smem, size = 0x200, scoped, tag = 'input window, operand 1, single buffered']
    #allocation8 [shape = 'u8[2048]{0}', space=vmem, size = 0x800, scoped, tag = 'output window, operand 0, single buffered']
    %7 = vsyncpa [#allocation4], 0
    %8 = vsyncpa [#allocation6], 0
    %9 = vsyncpa [#allocation5], 0
    // Predicated region
    $region2: #{tpu_custom_call.1} parent=1 // pred_check
      _
    $region3: #{tpu_custom_call.1} parent=1 // pred_check_branch
      %11 = sbr.rel (0) target = $region5
    $region4: #{tpu_custom_call.1} parent=1 // pred_region
      %13 = vsyncadd [#allocation4], 0
      %s14 = sshll.u32 %s0, 4
      %s15 = int_to_ptr.hbm [resolvable:$true] %s14
      %s16 = sshll.u32 [#allocation3], 4
      %s17 = int_to_ptr.vmem [resolvable:$true] %s16
      %22 = dma.hbm_to_vmem [thread:$0]  %s15, 256, %s17, [#allocation4], 128, 128, 8
    $region5: #{tpu_custom_call.1} parent=1 // pred_fallthru
      _
    // Predicated region
    $region6: #{tpu_custom_call.1} parent=1 // pred_check
      _
    $region7: #{tpu_custom_call.1} parent=1 // pred_check_branch
      %24 = sbr.rel (0) target = $region9
    $region8: #{tpu_custom_call.1} parent=1 // pred_region
      %26 = vsyncadd [#allocation6], 0
      %s28 = sshll.u32 %s1, 4
      %s29 = int_to_ptr.hbm [resolvable:$true] %s28
      %31 = dma.hbm_to_smem %s29, 16, [#allocation7], [#allocation6]
    $region9: #{tpu_custom_call.1} parent=1 // pred_fallthru
      _
    // Predicated region
    $region10: #{tpu_custom_call.1} parent=1 // pred_check
      _
    $region11: #{tpu_custom_call.1} parent=1 // pred_check_branch
      %33 = sbr.rel (0) target = $region13
    $region12: #{tpu_custom_call.1} parent=1 // pred_region
      %35 = dma.done [#allocation4], 256
    $region13: #{tpu_custom_call.1} parent=1 // pred_fallthru
      _
    // Predicated region
    $region14: #{tpu_custom_call.1} parent=1 // pred_check
      _
    $region15: #{tpu_custom_call.1} parent=1 // pred_check_branch
      %37 = sbr.rel (0) target = $region17
    $region16: #{tpu_custom_call.1} parent=1 // pred_region
      %39 = dma.done [#allocation6], 16
    $region17: #{tpu_custom_call.1} parent=1 // pred_fallthru
      _
    %40 = sfence
    %vm41 = vcmask 410624
    %42 = vst.msk [vmem:[#allocation2] sm:$0x3] %vm41, 0.0
    %vm43 = vcmask 828824
    %44 = vst.msk [vmem:[#allocation2 + $0x4] sm:$0x3] %vm43, 0.0
    %s45 = scalar_lea.vmem [#allocation2], 6
    %46 = vst.msk [vmem:[%s45] sm:$0x3] %vm41, 0.0
    %47 = vst.msk [vmem:[%s45 + $0x4] sm:$0x3] %vm43, 0.0
    %v48 = vld [vmem:[#allocation3] sm:$0xff]
    %50 = vst [vmem:[#allocation1] ss:$2 sm:$0xff] %v48
    %v51 = vld.sshfl [vmem:[#allocation1] sm:$0xff pattern:$0x75316420]
    %v52 = vld.sshfl [vmem:[#allocation1 + $0x8] sm:$0xff pattern:$0x75316420]
    %vm55 = vcmask 1043456
    %v56 = vsel %vm55, %v51, 0.0
    %v57 = vrot.slane %v56, 4
    %v58 = vadd.f32 %v56, %v57
    %v59 = vrot.slane %v58, 2
    %v60 = vadd.f32 %v58, %v59
    %v61 = vrot.slane %v60, 1
    %v62 = vadd.f32 %v60, %v61
    %v63 = vsel %vm55, %v52, 0.0
    %v64 = vrot.slane %v63, 4
    %v65 = vadd.f32 %v63, %v64
    %v66 = vrot.slane %v65, 2
    %v67 = vadd.f32 %v65, %v66
    %v68 = vrot.slane %v67, 1
    %v69 = vadd.f32 %v67, %v68
    %v70 = vadd.f32 %v62, 0.0
    %v71 = vadd.f32 %v69, 0.0
    %72 = vst [vmem:[#allocation1] ss:$2 sm:$0xff] %v48
    %v73 = vld.sshfl [vmem:[#allocation1] sm:$0xff pattern:$0x75316420]
    %v74 = vld.sshfl [vmem:[#allocation1 + $0x8] sm:$0xff pattern:$0x75316420]
    %v77 = vsel %vm55, %v73, -inf
    %v78 = vrot.slane %v77, 4
    %v79 = vmax.f32 %v77, %v78
    %v80 = vrot.slane %v79, 2
    %v81 = vmax.f32 %v79, %v80
    %v82 = vrot.slane %v81, 1
    %v83 = vmax.f32 %v81, %v82
    %v84 = vsel %vm55, %v74, -inf
    %v85 = vrot.slane %v84, 4
    %v86 = vmax.f32 %v84, %v85
    %v87 = vrot.slane %v86, 2
    %v88 = vmax.f32 %v86, %v87
    %v89 = vrot.slane %v88, 1
    %v90 = vmax.f32 %v88, %v89
    %v91 = vmul.f32 %v70, 0.25
    %v92 = vmul.f32 %v71, 0.25
    %v95 = vrot.slane %v92, 7
    %vm96 = vcmask 1040384
    %v97 = vsel %vm96, %v91, %v95
    %98 = vrot.lane.b32.xlu0 %v97, 51
    %v99 = vpop.permute.xlu0 %98
    %v100 = vrot.slane %v99, 7
    %vm101 = vcmask 416768
    %v102 = vsel %vm101, %v100, %v99
    %v104 = vlaneseq
    %vm105 = vcmp.ge.s32.totalorder %v104, 51
    %vm106 = vcmp.lt.s32.totalorder %v104, 307
    %vm107 = vmand %vm105, %vm106
    %108 = vst.msk [vmem:[#allocation2] ss:$2 sm:$0x7] %vm107, %v102
    %v111 = vrot.slane %v90, 7
    %v112 = vsel %vm96, %v83, %v111
    %113 = vrot.lane.b32.xlu0 %v112, 51
    %v114 = vpop.permute.xlu0 %113
    %v115 = vrot.slane %v114, 7
    %v116 = vsel %vm101, %v115, %v114
    %118 = vst.msk [vmem:[%s45] ss:$2 sm:$0x7] %vm107, %v116
    %s119 = scalar_lea.vmem [#allocation3], 8
    %v120 = vld [vmem:[%s119] sm:$0xff]
    %122 = vst [vmem:[#allocation1] ss:$2 sm:$0xff] %v120
    %v123 = vld.sshfl [vmem:[#allocation1] sm:$0xff pattern:$0x75316420]
    %v124 = vld.sshfl [vmem:[#allocation1 + $0x8] sm:$0xff pattern:$0x75316420]
    %v127 = vsel %vm55, %v123, 0.0
    %v128 = vrot.slane %v127, 4
    %v129 = vadd.f32 %v127, %v128
    %v130 = vrot.slane %v129, 2
    %v131 = vadd.f32 %v129, %v130
    %v132 = vrot.slane %v131, 1
    %v133 = vadd.f32 %v131, %v132
    %v134 = vsel %vm55, %v124, 0.0
    %v135 = vrot.slane %v134, 4
    %v136 = vadd.f32 %v134, %v135
    %v137 = vrot.slane %v136, 2
    %v138 = vadd.f32 %v136, %v137
    %v139 = vrot.slane %v138, 1
    %v140 = vadd.f32 %v138, %v139
    %v141 = vadd.f32 %v133, 0.0
    %v142 = vadd.f32 %v140, 0.0
    %143 = vst [vmem:[#allocation1] ss:$2 sm:$0xff] %v120
    %v144 = vld.sshfl [vmem:[#allocation1] sm:$0xff pattern:$0x75316420]
    %v145 = vld.sshfl [vmem:[#allocation1 + $0x8] sm:$0xff pattern:$0x75316420]
    %v148 = vsel %vm55, %v144, -inf
    %v149 = vrot.slane %v148, 4
    %v150 = vmax.f32 %v148, %v149
    %v151 = vrot.slane %v150, 2
    %v152 = vmax.f32 %v150, %v151
    %v153 = vrot.slane %v152, 1
    %v154 = vmax.f32 %v152, %v153
    %v155 = vsel %vm55, %v145, -inf
    %v156 = vrot.slane %v155, 4
    %v157 = vmax.f32 %v155, %v156
    %v158 = vrot.slane %v157, 2
    %v159 = vmax.f32 %v157, %v158
    %v160 = vrot.slane %v159, 1
    %v161 = vmax.f32 %v159, %v160
    %v162 = vmul.f32 %v141, 0.25
    %v163 = vmul.f32 %v142, 0.25
    %v166 = vrot.slane %v163, 7
    %v167 = vsel %vm96, %v162, %v166
    %168 = vrot.lane.b32.xlu0 %v167, 51
    %v169 = vpop.permute.xlu0 %168
    %v170 = vrot.slane %v169, 7
    %v171 = vsel %vm101, %v170, %v169
    %s173 = scalar_lea.vmem [#allocation2], 1
    %174 = vst.msk [vmem:[%s173] ss:$2 sm:$0x7] %vm107, %v171
    %v177 = vrot.slane %v161, 7
    %v178 = vsel %vm96, %v154, %v177
    %179 = vrot.lane.b32.xlu0 %v178, 51
    %v180 = vpop.permute.xlu0 %179
    %v181 = vrot.slane %v180, 7
    %v182 = vsel %vm101, %v181, %v180
    %s184 = scalar_lea.vmem %s45, 1 [#allocation2]
    %185 = vst.msk [vmem:[%s184] ss:$2 sm:$0x7] %vm107, %v182
    %v186 = vlaneseq
    %v187 = vand.u32 %v186, 127
    %v188 = vadd.s32 %v187, 128
    %v189 = vcvt.s32.f32 %v187
    %v190 = vcvt.s32.f32 %v188
    %v191 = vadd.f32 %v189, 0.0
    %v192 = vadd.f32 %v190, 0.0
    %v193 = vadd.f32 %v191, 0.5
    %v194 = vadd.f32 %v192, 0.5
    %v195 = vmul.f32 %v193, 0.0625
    %v196 = vmul.f32 %v194, 0.0625
    %v197 = vfloor.f32 %v195
    %v198 = vfloor.f32 %v196
    %v199 = vmul.f32 %v197, 16.0
    %v200 = vmul.f32 %v198, 16.0
    %v201 = vsub.f32 %v191, %v199
    %v202 = vsub.f32 %v192, %v200
    %s203 = sld [smem:[#allocation7]]
    %v204 = vld [vmem:[#allocation2] sm:$0xf]
    %v205 = vstv %s203
    %v206 = vmul.f32 %v205, %v204
    %v207 = vadd.f32 %v206, 0.0
    %s208 = sld [smem:[#allocation7 + $0x7]]
    %v209 = vld [vmem:[#allocation2] sm:$0x3f]
    %v210 = vstv %s208
    %v211 = vmul.f32 %v210, %v209
    %v212 = vadd.f32 %v211, 0.0
    %s213 = sld [smem:[#allocation7 + $0xe]]
    %v214 = vstv %s213
    %v215 = vmul.f32 %v214, %v209
    %217 = vrot.lane.b32.xlu0 %v215, 96
    %v218 = vpop.permute.xlu0 %217
    %v219 = vrot.slane %v218, 2
    %vm220 = vcmask 785408
    %v221 = vsel %vm220, %v218, %v219
    %v223 = vadd.f32 %v207, %v221
    %s224 = sld [smem:[#allocation7 + $0x15]]
    %v225 = vstv %s224
    %v226 = vmul.f32 %v225, %v209
    %228 = vrot.lane.b32.xlu0 %v226, 96
    %v229 = vpop.permute.xlu0 %228
    %v230 = vrot.slane %v229, 2
    %v231 = vsel %vm220, %v229, %v230
    %v233 = vadd.f32 %v212, %v231
    %s234 = sld [smem:[#allocation7 + $0x1c]]
    %v235 = vstv %s234
    %v236 = vmul.f32 %v235, %v209
    %238 = vrot.lane.b32.xlu0 %v236, 64
    %v239 = vpop.permute.xlu0 %238
    %v240 = vrot.slane %v239, 2
    %vm241 = vcmask 523264
    %v242 = vsel %vm241, %v239, %v240
    %v244 = vadd.f32 %v223, %v242
    %s245 = sld [smem:[#allocation7 + $0x23]]
    %v246 = vstv %s245
    %v247 = vmul.f32 %v246, %v209
    %249 = vrot.lane.b32.xlu0 %v247, 64
    %v250 = vpop.permute.xlu0 %249
    %v251 = vrot.slane %v250, 2
    %v252 = vsel %vm241, %v250, %v251
    %v254 = vadd.f32 %v233, %v252
    %s255 = sld [smem:[#allocation7 + $0x2a]]
    %v256 = vstv %s255
    %v257 = vmul.f32 %v256, %v209
    %259 = vrot.lane.b32.xlu0 %v257, 32
    %v260 = vpop.permute.xlu0 %259
    %v261 = vrot.slane %v260, 2
    %vm262 = vcmask 261120
    %v263 = vsel %vm262, %v260, %v261
    %v265 = vadd.f32 %v244, %v263
    %s266 = sld [smem:[#allocation7 + $0x31]]
    %v267 = vld [vmem:[%s45] sm:$0xf]
    %v268 = vstv %s266
    %v269 = vmul.f32 %v268, %v267
    %271 = vrot.lane.b32.xlu0 %v269, 16
    %v272 = vpop.permute.xlu0 %271
    %v273 = vrot.slane %v272, 6
    %vm274 = vcmask 130048
    %v275 = vsel %vm274, %v273, %v272
    %v277 = vadd.f32 %v254, %v275
    %s278 = sld [smem:[#allocation7 + $0x38]]
    %v279 = vld [vmem:[%s45] sm:$0x3f]
    %v280 = vstv %s278
    %v281 = vmul.f32 %v280, %v279
    %283 = vrot.lane.b32.xlu0 %v281, 112
    %v284 = vpop.permute.xlu0 %283
    %v285 = vrot.slane %v284, 2
    %vm286 = vcmask 916480
    %v287 = vsel %vm286, %v284, %v285
    %v289 = vadd.f32 %v265, %v287
    %s290 = sld [smem:[#allocation7 + $0x3f]]
    %v291 = vstv %s290
    %v292 = vmul.f32 %v291, %v279
    %294 = vrot.lane.b32.xlu0 %v292, 112
    %v295 = vpop.permute.xlu0 %294
    %v296 = vrot.slane %v295, 2
    %v297 = vsel %vm286, %v295, %v296
    %v299 = vadd.f32 %v277, %v297
    %s300 = sld [smem:[#allocation7 + $0x46]]
    %v301 = vstv %s300
    %v302 = vmul.f32 %v301, %v279
    %304 = vrot.lane.b32.xlu0 %v302, 80
    %v305 = vpop.permute.xlu0 %304
    %v306 = vrot.slane %v305, 2
    %vm307 = vcmask 654336
    %v308 = vsel %vm307, %v305, %v306
    %v310 = vadd.f32 %v289, %v308
    %s311 = sld [smem:[#allocation7 + $0x4d]]
    %v312 = vstv %s311
    %v313 = vmul.f32 %v312, %v279
    %315 = vrot.lane.b32.xlu0 %v313, 80
    %v316 = vpop.permute.xlu0 %315
    %v317 = vrot.slane %v316, 2
    %v318 = vsel %vm307, %v316, %v317
    %v320 = vadd.f32 %v299, %v318
    %s321 = sld [smem:[#allocation7 + $0x54]]
    %v322 = vstv %s321
    %v323 = vmul.f32 %v322, %v279
    %325 = vrot.lane.b32.xlu0 %v323, 48
    %v326 = vpop.permute.xlu0 %325
    %v327 = vrot.slane %v326, 2
    %vm328 = vcmask 392192
    %v329 = vsel %vm328, %v326, %v327
    %v331 = vadd.f32 %v310, %v329
    %s332 = sld [smem:[#allocation7 + $0x5b]]
    %v333 = vstv %s332
    %v334 = vmul.f32 %v333, %v279
    %336 = vrot.lane.b32.xlu0 %v334, 48
    %v337 = vpop.permute.xlu0 %336
    %v338 = vrot.slane %v337, 2
    %v339 = vsel %vm328, %v337, %v338
    %v341 = vadd.f32 %v320, %v339
    %343 = vrot.lane.b32.xlu0 %v341, 112
    %v344 = vpop.permute.xlu0 %343
    %v345 = vrot.slane %v344, 2
    %v346 = vsel %vm286, %v344, %v345
    %v348 = vadd.f32 %v331, %v346
    %vm349 = vcmp.ge.f32.partialorder %v201, 3.0
    %vm350 = vcmp.ge.f32.partialorder %v202, 3.0
    %vm351 = vcmp.lt.f32.partialorder %v201, 16.0
    %vm352 = vcmp.lt.f32.partialorder %v202, 16.0
    %vm353 = vmand %vm349, %vm351
    %vm354 = vmand %vm350, %vm352
    %v355 = vsel %vm353, 1, 0
    %v356 = vsel %vm354, 1, 0
    %vm357 = vcmp.eq.s32.totalorder %v355, 1
    %vm358 = vcmp.eq.s32.totalorder %v356, 1
    %360 = vst [vmem:[#allocation1] ss:$4 sm:$0xff] %v348
    %v361 = vld.sshfl [vmem:[#allocation1] sm:$0xff pattern:$0x73625140]
    %v362 = vld.sshfl [vmem:[#allocation1 + $0x8] sm:$0xff pattern:$0x73625140]
    %v365 = vsel %vm357, %v361, 0.0
    %v366 = vsel %vm358, %v362, 0.0
    %v367 = vadd.f32 %v365, 0.0
    %v368 = vadd.f32 %v366, 0.0
    %s369 = sld [smem:[#allocation7 + $0x1]]
    %v370 = vld [vmem:[#allocation2] sm:$0x3f]
    %v371 = vstv %s369
    %v372 = vmul.f32 %v371, %v370
    %v373 = vadd.f32 %v372, 0.0
    %s374 = sld [smem:[#allocation7 + $0x8]]
    %v375 = vstv %s374
    %v376 = vmul.f32 %v375, %v370
    %v377 = vadd.f32 %v376, 0.0
    %s378 = sld [smem:[#allocation7 + $0xf]]
    %v379 = vstv %s378
    %v380 = vmul.f32 %v379, %v370
    %382 = vrot.lane.b32.xlu0 %v380, 96
    %v383 = vpop.permute.xlu0 %382
    %v384 = vrot.slane %v383, 2
    %v385 = vsel %vm220, %v383, %v384
    %v387 = vadd.f32 %v373, %v385
    %s388 = sld [smem:[#allocation7 + $0x16]]
    %v389 = vstv %s388
    %v390 = vmul.f32 %v389, %v370
    %392 = vrot.lane.b32.xlu0 %v390, 96
    %v393 = vpop.permute.xlu0 %392
    %v394 = vrot.slane %v393, 2
    %v395 = vsel %vm220, %v393, %v394
    %v397 = vadd.f32 %v377, %v395
    %s398 = sld [smem:[#allocation7 + $0x1d]]
    %v399 = vstv %s398
    %v400 = vmul.f32 %v399, %v370
    %402 = vrot.lane.b32.xlu0 %v400, 64
    %v403 = vpop.permute.xlu0 %402
    %v404 = vrot.slane %v403, 2
    %v405 = vsel %vm241, %v403, %v404
    %v407 = vadd.f32 %v387, %v405
    %s408 = sld [smem:[#allocation7 + $0x24]]
    %v409 = vstv %s408
    %v410 = vmul.f32 %v409, %v370
    %412 = vrot.lane.b32.xlu0 %v410, 64
    %v413 = vpop.permute.xlu0 %412
    %v414 = vrot.slane %v413, 2
    %v415 = vsel %vm241, %v413, %v414
    %v417 = vadd.f32 %v397, %v415
    %s418 = sld [smem:[#allocation7 + $0x2b]]
    %v419 = vstv %s418
    %v420 = vmul.f32 %v419, %v370
    %422 = vrot.lane.b32.xlu0 %v420, 32
    %v423 = vpop.permute.xlu0 %422
    %v424 = vrot.slane %v423, 2
    %v425 = vsel %vm262, %v423, %v424
    %v427 = vadd.f32 %v407, %v425
    %s428 = sld [smem:[#allocation7 + $0x32]]
    %v429 = vld [vmem:[%s45] sm:$0x3f]
    %v430 = vstv %s428
    %v431 = vmul.f32 %v430, %v429
    %433 = vrot.lane.b32.xlu0 %v431, 16
    %v434 = vpop.permute.xlu0 %433
    %v435 = vrot.slane %v434, 6
    %v436 = vsel %vm274, %v435, %v434
    %v438 = vadd.f32 %v417, %v436
    %s439 = sld [smem:[#allocation7 + $0x39]]
    %v440 = vstv %s439
    %v441 = vmul.f32 %v440, %v429
    %443 = vrot.lane.b32.xlu0 %v441, 112
    %v444 = vpop.permute.xlu0 %443
    %v445 = vrot.slane %v444, 2
    %v446 = vsel %vm286, %v444, %v445
    %v448 = vadd.f32 %v427, %v446
    %s449 = sld [smem:[#allocation7 + $0x40]]
    %v450 = vstv %s449
    %v451 = vmul.f32 %v450, %v429
    %453 = vrot.lane.b32.xlu0 %v451, 112
    %v454 = vpop.permute.xlu0 %453
    %v455 = vrot.slane %v454, 2
    %v456 = vsel %vm286, %v454, %v455
    %v458 = vadd.f32 %v438, %v456
    %s459 = sld [smem:[#allocation7 + $0x47]]
    %v460 = vstv %s459
    %v461 = vmul.f32 %v460, %v429
    %463 = vrot.lane.b32.xlu0 %v461, 80
    %v464 = vpop.permute.xlu0 %463
    %v465 = vrot.slane %v464, 2
    %v466 = vsel %vm307, %v464, %v465
    %v468 = vadd.f32 %v448, %v466
    %s469 = sld [smem:[#allocation7 + $0x4e]]
    %v470 = vstv %s469
    %v471 = vmul.f32 %v470, %v429
    %473 = vrot.lane.b32.xlu0 %v471, 80
    %v474 = vpop.permute.xlu0 %473
    %v475 = vrot.slane %v474, 2
    %v476 = vsel %vm307, %v474, %v475
    %v478 = vadd.f32 %v458, %v476
    %s479 = sld [smem:[#allocation7 + $0x55]]
    %v480 = vstv %s479
    %v481 = vmul.f32 %v480, %v429
    %483 = vrot.lane.b32.xlu0 %v481, 48
    %v484 = vpop.permute.xlu0 %483
    %v485 = vrot.slane %v484, 2
    %v486 = vsel %vm328, %v484, %v485
    %v488 = vadd.f32 %v468, %v486
    %s489 = sld [smem:[#allocation7 + $0x5c]]
    %v490 = vstv %s489
    %v491 = vmul.f32 %v490, %v429
    %493 = vrot.lane.b32.xlu0 %v491, 48
    %v494 = vpop.permute.xlu0 %493
    %v495 = vrot.slane %v494, 2
    %v496 = vsel %vm328, %v494, %v495
    %v498 = vadd.f32 %v478, %v496
    %500 = vrot.lane.b32.xlu0 %v498, 112
    %v501 = vpop.permute.xlu0 %500
    %v502 = vrot.slane %v501, 2
    %v503 = vsel %vm286, %v501, %v502
    %v505 = vadd.f32 %v488, %v503
    %vm506 = vcmp.ge.f32.partialorder %v201, 2.0
    %vm507 = vcmp.ge.f32.partialorder %v202, 2.0
    %vm508 = vmand %vm506, %vm351
    %vm509 = vmand %vm507, %vm352
    %v510 = vsel %vm508, 1, 0
    %v511 = vsel %vm509, 1, 0
    %vm512 = vcmp.eq.s32.totalorder %v510, 1
    %vm513 = vcmp.eq.s32.totalorder %v511, 1
    %515 = vst [vmem:[#allocation1] ss:$4 sm:$0xff] %v505
    %v516 = vld.sshfl [vmem:[#allocation1] sm:$0xff pattern:$0x73625140]
    %v517 = vld.sshfl [vmem:[#allocation1 + $0x8] sm:$0xff pattern:$0x73625140]
    %v518 = vld.sshfl [vmem:[#allocation1 + $0x10] sm:$0xff pattern:$0x73625140]
    %519 = vrot.lane.b32.xlu0 %v516, 127
    %v520 = vpop.permute.xlu0 %519
    %521 = vrot.lane.b32.xlu0 %v517, 127
    %v522 = vpop.permute.xlu0 %521
    %523 = vrot.lane.b32.xlu0 %v518, 127
    %v524 = vpop.permute.xlu0 %523
    %vm525 = vcmask 1039360
    %v526 = vsel %vm525, %v520, %v522
    %v527 = vsel %vm525, %v522, %v524
    %v530 = vsel %vm512, %v526, 0.0
    %v531 = vsel %vm513, %v527, 0.0
    %v532 = vadd.f32 %v367, %v530
    %v533 = vadd.f32 %v368, %v531
    %s534 = sld [smem:[#allocation7 + $0x2]]
    %v535 = vld [vmem:[#allocation2] sm:$0x3f]
    %v536 = vstv %s534
    %v537 = vmul.f32 %v536, %v535
    %v538 = vadd.f32 %v537, 0.0
    %s539 = sld [smem:[#allocation7 + $0x9]]
    %v540 = vstv %s539
    %v541 = vmul.f32 %v540, %v535
    %v542 = vadd.f32 %v541, 0.0
    %s543 = sld [smem:[#allocation7 + $0x10]]
    %v544 = vstv %s543
    %v545 = vmul.f32 %v544, %v535
    %547 = vrot.lane.b32.xlu0 %v545, 96
    %v548 = vpop.permute.xlu0 %547
    %v549 = vrot.slane %v548, 2
    %v550 = vsel %vm220, %v548, %v549
    %v552 = vadd.f32 %v538, %v550
    %s553 = sld [smem:[#allocation7 + $0x17]]
    %v554 = vstv %s553
    %v555 = vmul.f32 %v554, %v535
    %557 = vrot.lane.b32.xlu0 %v555, 96
    %v558 = vpop.permute.xlu0 %557
    %v559 = vrot.slane %v558, 2
    %v560 = vsel %vm220, %v558, %v559
    %v562 = vadd.f32 %v542, %v560
    %s563 = sld [smem:[#allocation7 + $0x1e]]
    %v564 = vstv %s563
    %v565 = vmul.f32 %v564, %v535
    %567 = vrot.lane.b32.xlu0 %v565, 64
    %v568 = vpop.permute.xlu0 %567
    %v569 = vrot.slane %v568, 2
    %v570 = vsel %vm241, %v568, %v569
    %v572 = vadd.f32 %v552, %v570
    %s573 = sld [smem:[#allocation7 + $0x25]]
    %v574 = vstv %s573
    %v575 = vmul.f32 %v574, %v535
    %577 = vrot.lane.b32.xlu0 %v575, 64
    %v578 = vpop.permute.xlu0 %577
    %v579 = vrot.slane %v578, 2
    %v580 = vsel %vm241, %v578, %v579
    %v582 = vadd.f32 %v562, %v580
    %s583 = sld [smem:[#allocation7 + $0x2c]]
    %v584 = vstv %s583
    %v585 = vmul.f32 %v584, %v535
    %587 = vrot.lane.b32.xlu0 %v585, 32
    %v588 = vpop.permute.xlu0 %587
    %v589 = vrot.slane %v588, 2
    %v590 = vsel %vm262, %v588, %v589
    %v592 = vadd.f32 %v572, %v590
    %s593 = sld [smem:[#allocation7 + $0x33]]
    %v594 = vld [vmem:[%s45] sm:$0x3f]
    %v595 = vstv %s593
    %v596 = vmul.f32 %v595, %v594
    %598 = vrot.lane.b32.xlu0 %v596, 16
    %v599 = vpop.permute.xlu0 %598
    %v600 = vrot.slane %v599, 6
    %v601 = vsel %vm274, %v600, %v599
    %v603 = vadd.f32 %v582, %v601
    %s604 = sld [smem:[#allocation7 + $0x3a]]
    %v605 = vstv %s604
    %v606 = vmul.f32 %v605, %v594
    %608 = vrot.lane.b32.xlu0 %v606, 112
    %v609 = vpop.permute.xlu0 %608
    %v610 = vrot.slane %v609, 2
    %v611 = vsel %vm286, %v609, %v610
    %v613 = vadd.f32 %v592, %v611
    %s614 = sld [smem:[#allocation7 + $0x41]]
    %v615 = vstv %s614
    %v616 = vmul.f32 %v615, %v594
    %618 = vrot.lane.b32.xlu0 %v616, 112
    %v619 = vpop.permute.xlu0 %618
    %v620 = vrot.slane %v619, 2
    %v621 = vsel %vm286, %v619, %v620
    %v623 = vadd.f32 %v603, %v621
    %s624 = sld [smem:[#allocation7 + $0x48]]
    %v625 = vstv %s624
    %v626 = vmul.f32 %v625, %v594
    %628 = vrot.lane.b32.xlu0 %v626, 80
    %v629 = vpop.permute.xlu0 %628
    %v630 = vrot.slane %v629, 2
    %v631 = vsel %vm307, %v629, %v630
    %v633 = vadd.f32 %v613, %v631
    %s634 = sld [smem:[#allocation7 + $0x4f]]
    %v635 = vstv %s634
    %v636 = vmul.f32 %v635, %v594
    %638 = vrot.lane.b32.xlu0 %v636, 80
    %v639 = vpop.permute.xlu0 %638
    %v640 = vrot.slane %v639, 2
    %v641 = vsel %vm307, %v639, %v640
    %v643 = vadd.f32 %v623, %v641
    %s644 = sld [smem:[#allocation7 + $0x56]]
    %v645 = vstv %s644
    %v646 = vmul.f32 %v645, %v594
    %648 = vrot.lane.b32.xlu0 %v646, 48
    %v649 = vpop.permute.xlu0 %648
    %v650 = vrot.slane %v649, 2
    %v651 = vsel %vm328, %v649, %v650
    %v653 = vadd.f32 %v633, %v651
    %s654 = sld [smem:[#allocation7 + $0x5d]]
    %v655 = vstv %s654
    %v656 = vmul.f32 %v655, %v594
    %658 = vrot.lane.b32.xlu0 %v656, 48
    %v659 = vpop.permute.xlu0 %658
    %v660 = vrot.slane %v659, 2
    %v661 = vsel %vm328, %v659, %v660
    %v663 = vadd.f32 %v643, %v661
    %665 = vrot.lane.b32.xlu0 %v663, 112
    %v666 = vpop.permute.xlu0 %665
    %v667 = vrot.slane %v666, 2
    %v668 = vsel %vm286, %v666, %v667
    %v670 = vadd.f32 %v653, %v668
    %vm671 = vcmp.ge.f32.partialorder %v201, 1.0
    %vm672 = vcmp.ge.f32.partialorder %v202, 1.0
    %vm673 = vmand %vm671, %vm351
    %vm674 = vmand %vm672, %vm352
    %v675 = vsel %vm673, 1, 0
    %v676 = vsel %vm674, 1, 0
    %vm677 = vcmp.eq.s32.totalorder %v675, 1
    %vm678 = vcmp.eq.s32.totalorder %v676, 1
    %680 = vst [vmem:[#allocation1] ss:$4 sm:$0xff] %v670
    %v681 = vld.sshfl [vmem:[#allocation1] sm:$0xff pattern:$0x73625140]
    %v682 = vld.sshfl [vmem:[#allocation1 + $0x8] sm:$0xff pattern:$0x73625140]
    %v683 = vld.sshfl [vmem:[#allocation1 + $0x10] sm:$0xff pattern:$0x73625140]
    %684 = vrot.lane.b32.xlu0 %v681, 126
    %v685 = vpop.permute.xlu0 %684
    %686 = vrot.lane.b32.xlu0 %v682, 126
    %v687 = vpop.permute.xlu0 %686
    %688 = vrot.lane.b32.xlu0 %v683, 126
    %v689 = vpop.permute.xlu0 %688
    %vm690 = vcmask 1031168
    %v691 = vsel %vm690, %v685, %v687
    %v692 = vsel %vm690, %v687, %v689
    %v695 = vsel %vm677, %v691, 0.0
    %v696 = vsel %vm678, %v692, 0.0
    %v697 = vadd.f32 %v532, %v695
    %v698 = vadd.f32 %v533, %v696
    %s699 = sld [smem:[#allocation7 + $0x3]]
    %v700 = vld [vmem:[#allocation2] sm:$0x3f]
    %v701 = vstv %s699
    %v702 = vmul.f32 %v701, %v700
    %v703 = vadd.f32 %v702, 0.0
    %s704 = sld [smem:[#allocation7 + $0xa]]
    %v705 = vstv %s704
    %v706 = vmul.f32 %v705, %v700
    %v707 = vadd.f32 %v706, 0.0
    %s708 = sld [smem:[#allocation7 + $0x11]]
    %v709 = vstv %s708
    %v710 = vmul.f32 %v709, %v700
    %712 = vrot.lane.b32.xlu0 %v710, 96
    %v713 = vpop.permute.xlu0 %712
    %v714 = vrot.slane %v713, 2
    %v715 = vsel %vm220, %v713, %v714
    %v717 = vadd.f32 %v703, %v715
    %s718 = sld [smem:[#allocation7 + $0x18]]
    %v719 = vstv %s718
    %v720 = vmul.f32 %v719, %v700
    %722 = vrot.lane.b32.xlu0 %v720, 96
    %v723 = vpop.permute.xlu0 %722
    %v724 = vrot.slane %v723, 2
    %v725 = vsel %vm220, %v723, %v724
    %v727 = vadd.f32 %v707, %v725
    %s728 = sld [smem:[#allocation7 + $0x1f]]
    %v729 = vstv %s728
    %v730 = vmul.f32 %v729, %v700
    %732 = vrot.lane.b32.xlu0 %v730, 64
    %v733 = vpop.permute.xlu0 %732
    %v734 = vrot.slane %v733, 2
    %v735 = vsel %vm241, %v733, %v734
    %v737 = vadd.f32 %v717, %v735
    %s738 = sld [smem:[#allocation7 + $0x26]]
    %v739 = vstv %s738
    %v740 = vmul.f32 %v739, %v700
    %742 = vrot.lane.b32.xlu0 %v740, 64
    %v743 = vpop.permute.xlu0 %742
    %v744 = vrot.slane %v743, 2
    %v745 = vsel %vm241, %v743, %v744
    %v747 = vadd.f32 %v727, %v745
    %s748 = sld [smem:[#allocation7 + $0x2d]]
    %v749 = vstv %s748
    %v750 = vmul.f32 %v749, %v700
    %752 = vrot.lane.b32.xlu0 %v750, 32
    %v753 = vpop.permute.xlu0 %752
    %v754 = vrot.slane %v753, 2
    %v755 = vsel %vm262, %v753, %v754
    %v757 = vadd.f32 %v737, %v755
    %s758 = sld [smem:[#allocation7 + $0x34]]
    %v759 = vld [vmem:[%s45] sm:$0x3f]
    %v760 = vstv %s758
    %v761 = vmul.f32 %v760, %v759
    %763 = vrot.lane.b32.xlu0 %v761, 16
    %v764 = vpop.permute.xlu0 %763
    %v765 = vrot.slane %v764, 6
    %v766 = vsel %vm274, %v765, %v764
    %v768 = vadd.f32 %v747, %v766
    %s769 = sld [smem:[#allocation7 + $0x3b]]
    %v770 = vstv %s769
    %v771 = vmul.f32 %v770, %v759
    %773 = vrot.lane.b32.xlu0 %v771, 112
    %v774 = vpop.permute.xlu0 %773
    %v775 = vrot.slane %v774, 2
    %v776 = vsel %vm286, %v774, %v775
    %v778 = vadd.f32 %v757, %v776
    %s779 = sld [smem:[#allocation7 + $0x42]]
    %v780 = vstv %s779
    %v781 = vmul.f32 %v780, %v759
    %783 = vrot.lane.b32.xlu0 %v781, 112
    %v784 = vpop.permute.xlu0 %783
    %v785 = vrot.slane %v784, 2
    %v786 = vsel %vm286, %v784, %v785
    %v788 = vadd.f32 %v768, %v786
    %s789 = sld [smem:[#allocation7 + $0x49]]
    %v790 = vstv %s789
    %v791 = vmul.f32 %v790, %v759
    %793 = vrot.lane.b32.xlu0 %v791, 80
    %v794 = vpop.permute.xlu0 %793
    %v795 = vrot.slane %v794, 2
    %v796 = vsel %vm307, %v794, %v795
    %v798 = vadd.f32 %v778, %v796
    %s799 = sld [smem:[#allocation7 + $0x50]]
    %v800 = vstv %s799
    %v801 = vmul.f32 %v800, %v759
    %803 = vrot.lane.b32.xlu0 %v801, 80
    %v804 = vpop.permute.xlu0 %803
    %v805 = vrot.slane %v804, 2
    %v806 = vsel %vm307, %v804, %v805
    %v808 = vadd.f32 %v788, %v806
    %s809 = sld [smem:[#allocation7 + $0x57]]
    %v810 = vstv %s809
    %v811 = vmul.f32 %v810, %v759
    %813 = vrot.lane.b32.xlu0 %v811, 48
    %v814 = vpop.permute.xlu0 %813
    %v815 = vrot.slane %v814, 2
    %v816 = vsel %vm328, %v814, %v815
    %v818 = vadd.f32 %v798, %v816
    %s819 = sld [smem:[#allocation7 + $0x5e]]
    %v820 = vstv %s819
    %v821 = vmul.f32 %v820, %v759
    %823 = vrot.lane.b32.xlu0 %v821, 48
    %v824 = vpop.permute.xlu0 %823
    %v825 = vrot.slane %v824, 2
    %v826 = vsel %vm328, %v824, %v825
    %v828 = vadd.f32 %v808, %v826
    %830 = vrot.lane.b32.xlu0 %v828, 112
    %v831 = vpop.permute.xlu0 %830
    %v832 = vrot.slane %v831, 2
    %v833 = vsel %vm286, %v831, %v832
    %v835 = vadd.f32 %v818, %v833
    %837 = vst [vmem:[#allocation1] ss:$4 sm:$0xff] %v835
    %v838 = vld.sshfl [vmem:[#allocation1] sm:$0xff pattern:$0x73625140]
    %v839 = vld.sshfl [vmem:[#allocation1 + $0x8] sm:$0xff pattern:$0x73625140]
    %v840 = vld.sshfl [vmem:[#allocation1 + $0x10] sm:$0xff pattern:$0x73625140]
    %841 = vrot.lane.b32.xlu0 %v838, 125
    %v842 = vpop.permute.xlu0 %841
    %843 = vrot.lane.b32.xlu0 %v839, 125
    %v844 = vpop.permute.xlu0 %843
    %845 = vrot.lane.b32.xlu0 %v840, 125
    %v846 = vpop.permute.xlu0 %845
    %vm847 = vcmask 1022976
    %v848 = vsel %vm847, %v842, %v844
    %v849 = vsel %vm847, %v844, %v846
    %v852 = vadd.f32 %v697, %v848
    %v853 = vadd.f32 %v698, %v849
    %s854 = sld [smem:[#allocation7 + $0x4]]
    %v855 = vld [vmem:[#allocation2] sm:$0x3f]
    %v856 = vstv %s854
    %v857 = vmul.f32 %v856, %v855
    %v858 = vadd.f32 %v857, 0.0
    %s859 = sld [smem:[#allocation7 + $0xb]]
    %v860 = vstv %s859
    %v861 = vmul.f32 %v860, %v855
    %v862 = vadd.f32 %v861, 0.0
    %s863 = sld [smem:[#allocation7 + $0x12]]
    %v864 = vstv %s863
    %v865 = vmul.f32 %v864, %v855
    %867 = vrot.lane.b32.xlu0 %v865, 96
    %v868 = vpop.permute.xlu0 %867
    %v869 = vrot.slane %v868, 2
    %v870 = vsel %vm220, %v868, %v869
    %v872 = vadd.f32 %v858, %v870
    %s873 = sld [smem:[#allocation7 + $0x19]]
    %v874 = vstv %s873
    %v875 = vmul.f32 %v874, %v855
    %877 = vrot.lane.b32.xlu0 %v875, 96
    %v878 = vpop.permute.xlu0 %877
    %v879 = vrot.slane %v878, 2
    %v880 = vsel %vm220, %v878, %v879
    %v882 = vadd.f32 %v862, %v880
    %s883 = sld [smem:[#allocation7 + $0x20]]
    %v884 = vstv %s883
    %v885 = vmul.f32 %v884, %v855
    %887 = vrot.lane.b32.xlu0 %v885, 64
    %v888 = vpop.permute.xlu0 %887
    %v889 = vrot.slane %v888, 2
    %v890 = vsel %vm241, %v888, %v889
    %v892 = vadd.f32 %v872, %v890
    %s893 = sld [smem:[#allocation7 + $0x27]]
    %v894 = vstv %s893
    %v895 = vmul.f32 %v894, %v855
    %897 = vrot.lane.b32.xlu0 %v895, 64
    %v898 = vpop.permute.xlu0 %897
    %v899 = vrot.slane %v898, 2
    %v900 = vsel %vm241, %v898, %v899
    %v902 = vadd.f32 %v882, %v900
    %s903 = sld [smem:[#allocation7 + $0x2e]]
    %v904 = vstv %s903
    %v905 = vmul.f32 %v904, %v855
    %907 = vrot.lane.b32.xlu0 %v905, 32
    %v908 = vpop.permute.xlu0 %907
    %v909 = vrot.slane %v908, 2
    %v910 = vsel %vm262, %v908, %v909
    %v912 = vadd.f32 %v892, %v910
    %s913 = sld [smem:[#allocation7 + $0x35]]
    %v914 = vld [vmem:[%s45] sm:$0x3f]
    %v915 = vstv %s913
    %v916 = vmul.f32 %v915, %v914
    %918 = vrot.lane.b32.xlu0 %v916, 16
    %v919 = vpop.permute.xlu0 %918
    %v920 = vrot.slane %v919, 6
    %v921 = vsel %vm274, %v920, %v919
    %v923 = vadd.f32 %v902, %v921
    %s924 = sld [smem:[#allocation7 + $0x3c]]
    %v925 = vstv %s924
    %v926 = vmul.f32 %v925, %v914
    %928 = vrot.lane.b32.xlu0 %v926, 112
    %v929 = vpop.permute.xlu0 %928
    %v930 = vrot.slane %v929, 2
    %v931 = vsel %vm286, %v929, %v930
    %v933 = vadd.f32 %v912, %v931
    %s934 = sld [smem:[#allocation7 + $0x43]]
    %v935 = vstv %s934
    %v936 = vmul.f32 %v935, %v914
    %938 = vrot.lane.b32.xlu0 %v936, 112
    %v939 = vpop.permute.xlu0 %938
    %v940 = vrot.slane %v939, 2
    %v941 = vsel %vm286, %v939, %v940
    %v943 = vadd.f32 %v923, %v941
    %s944 = sld [smem:[#allocation7 + $0x4a]]
    %v945 = vstv %s944
    %v946 = vmul.f32 %v945, %v914
    %948 = vrot.lane.b32.xlu0 %v946, 80
    %v949 = vpop.permute.xlu0 %948
    %v950 = vrot.slane %v949, 2
    %v951 = vsel %vm307, %v949, %v950
    %v953 = vadd.f32 %v933, %v951
    %s954 = sld [smem:[#allocation7 + $0x51]]
    %v955 = vstv %s954
    %v956 = vmul.f32 %v955, %v914
    %958 = vrot.lane.b32.xlu0 %v956, 80
    %v959 = vpop.permute.xlu0 %958
    %v960 = vrot.slane %v959, 2
    %v961 = vsel %vm307, %v959, %v960
    %v963 = vadd.f32 %v943, %v961
    %s964 = sld [smem:[#allocation7 + $0x58]]
    %v965 = vstv %s964
    %v966 = vmul.f32 %v965, %v914
    %968 = vrot.lane.b32.xlu0 %v966, 48
    %v969 = vpop.permute.xlu0 %968
    %v970 = vrot.slane %v969, 2
    %v971 = vsel %vm328, %v969, %v970
    %v973 = vadd.f32 %v953, %v971
    %s974 = sld [smem:[#allocation7 + $0x5f]]
    %v975 = vstv %s974
    %v976 = vmul.f32 %v975, %v914
    %978 = vrot.lane.b32.xlu0 %v976, 48
    %v979 = vpop.permute.xlu0 %978
    %v980 = vrot.slane %v979, 2
    %v981 = vsel %vm328, %v979, %v980
    %v983 = vadd.f32 %v963, %v981
    %985 = vrot.lane.b32.xlu0 %v983, 112
    %v986 = vpop.permute.xlu0 %985
    %v987 = vrot.slane %v986, 2
    %v988 = vsel %vm286, %v986, %v987
    %v990 = vadd.f32 %v973, %v988
    %vm991 = vcmp.ge.f32.partialorder %v201, 0.0
    %vm992 = vcmp.ge.f32.partialorder %v202, 0.0
    %vm993 = vcmp.lt.f32.partialorder %v201, 15.0
    %vm994 = vcmp.lt.f32.partialorder %v202, 15.0
    %vm995 = vmand %vm991, %vm993
    %vm996 = vmand %vm992, %vm994
    %v997 = vsel %vm995, 1, 0
    %v998 = vsel %vm996, 1, 0
    %vm999 = vcmp.eq.s32.totalorder %v997, 1
    %vm1000 = vcmp.eq.s32.totalorder %v998, 1
    %1002 = vst [vmem:[#allocation1] ss:$4 sm:$0xff] %v990
    %v1003 = vld.sshfl [vmem:[#allocation1] sm:$0xff pattern:$0x73625140]
    %v1004 = vld.sshfl [vmem:[#allocation1 + $0x8] sm:$0xff pattern:$0x73625140]
    %v1005 = vld.sshfl [vmem:[#allocation1 + $0x10] sm:$0xff pattern:$0x73625140]
    %1006 = vrot.lane.b32.xlu0 %v1003, 124
    %v1007 = vpop.permute.xlu0 %1006
    %1008 = vrot.lane.b32.xlu0 %v1004, 124
    %v1009 = vpop.permute.xlu0 %1008
    %1010 = vrot.lane.b32.xlu0 %v1005, 124
    %v1011 = vpop.permute.xlu0 %1010
    %vm1012 = vcmask 1014784
    %v1013 = vsel %vm1012, %v1007, %v1009
    %v1014 = vsel %vm1012, %v1009, %v1011
    %v1017 = vsel %vm999, %v1013, 0.0
    %v1018 = vsel %vm1000, %v1014, 0.0
    %v1019 = vadd.f32 %v852, %v1017
    %v1020 = vadd.f32 %v853, %v1018
    %s1021 = sld [smem:[#allocation7 + $0x5]]
    %v1022 = vld [vmem:[#allocation2] sm:$0x3f]
    %v1023 = vstv %s1021
    %v1024 = vmul.f32 %v1023, %v1022
    %v1025 = vadd.f32 %v1024, 0.0
    %s1026 = sld [smem:[#allocation7 + $0xc]]
    %v1027 = vstv %s1026
    %v1028 = vmul.f32 %v1027, %v1022
    %v1029 = vadd.f32 %v1028, 0.0
    %s1030 = sld [smem:[#allocation7 + $0x13]]
    %v1031 = vstv %s1030
    %v1032 = vmul.f32 %v1031, %v1022
    %1034 = vrot.lane.b32.xlu0 %v1032, 96
    %v1035 = vpop.permute.xlu0 %1034
    %v1036 = vrot.slane %v1035, 2
    %v1037 = vsel %vm220, %v1035, %v1036
    %v1039 = vadd.f32 %v1025, %v1037
    %s1040 = sld [smem:[#allocation7 + $0x1a]]
    %v1041 = vstv %s1040
    %v1042 = vmul.f32 %v1041, %v1022
    %1044 = vrot.lane.b32.xlu0 %v1042, 96
    %v1045 = vpop.permute.xlu0 %1044
    %v1046 = vrot.slane %v1045, 2
    %v1047 = vsel %vm220, %v1045, %v1046
    %v1049 = vadd.f32 %v1029, %v1047
    %s1050 = sld [smem:[#allocation7 + $0x21]]
    %v1051 = vstv %s1050
    %v1052 = vmul.f32 %v1051, %v1022
    %1054 = vrot.lane.b32.xlu0 %v1052, 64
    %v1055 = vpop.permute.xlu0 %1054
    %v1056 = vrot.slane %v1055, 2
    %v1057 = vsel %vm241, %v1055, %v1056
    %v1059 = vadd.f32 %v1039, %v1057
    %s1060 = sld [smem:[#allocation7 + $0x28]]
    %v1061 = vstv %s1060
    %v1062 = vmul.f32 %v1061, %v1022
    %1064 = vrot.lane.b32.xlu0 %v1062, 64
    %v1065 = vpop.permute.xlu0 %1064
    %v1066 = vrot.slane %v1065, 2
    %v1067 = vsel %vm241, %v1065, %v1066
    %v1069 = vadd.f32 %v1049, %v1067
    %s1070 = sld [smem:[#allocation7 + $0x2f]]
    %v1071 = vstv %s1070
    %v1072 = vmul.f32 %v1071, %v1022
    %1074 = vrot.lane.b32.xlu0 %v1072, 32
    %v1075 = vpop.permute.xlu0 %1074
    %v1076 = vrot.slane %v1075, 2
    %v1077 = vsel %vm262, %v1075, %v1076
    %v1079 = vadd.f32 %v1059, %v1077
    %s1080 = sld [smem:[#allocation7 + $0x36]]
    %v1081 = vld [vmem:[%s45] sm:$0x3f]
    %v1082 = vstv %s1080
    %v1083 = vmul.f32 %v1082, %v1081
    %1085 = vrot.lane.b32.xlu0 %v1083, 16
    %v1086 = vpop.permute.xlu0 %1085
    %v1087 = vrot.slane %v1086, 6
    %v1088 = vsel %vm274, %v1087, %v1086
    %v1090 = vadd.f32 %v1069, %v1088
    %s1091 = sld [smem:[#allocation7 + $0x3d]]
    %v1092 = vstv %s1091
    %v1093 = vmul.f32 %v1092, %v1081
    %1095 = vrot.lane.b32.xlu0 %v1093, 112
    %v1096 = vpop.permute.xlu0 %1095
    %v1097 = vrot.slane %v1096, 2
    %v1098 = vsel %vm286, %v1096, %v1097
    %v1100 = vadd.f32 %v1079, %v1098
    %s1101 = sld [smem:[#allocation7 + $0x44]]
    %v1102 = vstv %s1101
    %v1103 = vmul.f32 %v1102, %v1081
    %1105 = vrot.lane.b32.xlu0 %v1103, 112
    %v1106 = vpop.permute.xlu0 %1105
    %v1107 = vrot.slane %v1106, 2
    %v1108 = vsel %vm286, %v1106, %v1107
    %v1110 = vadd.f32 %v1090, %v1108
    %s1111 = sld [smem:[#allocation7 + $0x4b]]
    %v1112 = vstv %s1111
    %v1113 = vmul.f32 %v1112, %v1081
    %1115 = vrot.lane.b32.xlu0 %v1113, 80
    %v1116 = vpop.permute.xlu0 %1115
    %v1117 = vrot.slane %v1116, 2
    %v1118 = vsel %vm307, %v1116, %v1117
    %v1120 = vadd.f32 %v1100, %v1118
    %s1121 = sld [smem:[#allocation7 + $0x52]]
    %v1122 = vstv %s1121
    %v1123 = vmul.f32 %v1122, %v1081
    %1125 = vrot.lane.b32.xlu0 %v1123, 80
    %v1126 = vpop.permute.xlu0 %1125
    %v1127 = vrot.slane %v1126, 2
    %v1128 = vsel %vm307, %v1126, %v1127
    %v1130 = vadd.f32 %v1110, %v1128
    %s1131 = sld [smem:[#allocation7 + $0x59]]
    %v1132 = vstv %s1131
    %v1133 = vmul.f32 %v1132, %v1081
    %1135 = vrot.lane.b32.xlu0 %v1133, 48
    %v1136 = vpop.permute.xlu0 %1135
    %v1137 = vrot.slane %v1136, 2
    %v1138 = vsel %vm328, %v1136, %v1137
    %v1140 = vadd.f32 %v1120, %v1138
    %s1141 = sld [smem:[#allocation7 + $0x60]]
    %v1142 = vstv %s1141
    %v1143 = vmul.f32 %v1142, %v1081
    %1145 = vrot.lane.b32.xlu0 %v1143, 48
    %v1146 = vpop.permute.xlu0 %1145
    %v1147 = vrot.slane %v1146, 2
    %v1148 = vsel %vm328, %v1146, %v1147
    %v1150 = vadd.f32 %v1130, %v1148
    %1152 = vrot.lane.b32.xlu0 %v1150, 112
    %v1153 = vpop.permute.xlu0 %1152
    %v1154 = vrot.slane %v1153, 2
    %v1155 = vsel %vm286, %v1153, %v1154
    %v1157 = vadd.f32 %v1140, %v1155
    %vm1158 = vcmp.lt.f32.partialorder %v201, 14.0
    %vm1159 = vcmp.lt.f32.partialorder %v202, 14.0
    %vm1160 = vmand %vm991, %vm1158
    %vm1161 = vmand %vm992, %vm1159
    %v1162 = vsel %vm1160, 1, 0
    %v1163 = vsel %vm1161, 1, 0
    %vm1164 = vcmp.eq.s32.totalorder %v1162, 1
    %vm1165 = vcmp.eq.s32.totalorder %v1163, 1
    %1167 = vst [vmem:[#allocation1] ss:$4 sm:$0xff] %v1157
    %v1168 = vld.sshfl [vmem:[#allocation1] sm:$0xff pattern:$0x73625140]
    %v1169 = vld.sshfl [vmem:[#allocation1 + $0x8] sm:$0xff pattern:$0x73625140]
    %v1170 = vld.sshfl [vmem:[#allocation1 + $0x10] sm:$0xff pattern:$0x73625140]
    %1171 = vrot.lane.b32.xlu0 %v1168, 123
    %v1172 = vpop.permute.xlu0 %1171
    %1173 = vrot.lane.b32.xlu0 %v1169, 123
    %v1174 = vpop.permute.xlu0 %1173
    %1175 = vrot.lane.b32.xlu0 %v1170, 123
    %v1176 = vpop.permute.xlu0 %1175
    %vm1177 = vcmask 1006592
    %v1178 = vsel %vm1177, %v1172, %v1174
    %v1179 = vsel %vm1177, %v1174, %v1176
    %v1182 = vsel %vm1164, %v1178, 0.0
    %v1183 = vsel %vm1165, %v1179, 0.0
    %v1184 = vadd.f32 %v1019, %v1182
    %v1185 = vadd.f32 %v1020, %v1183
    %s1186 = sld [smem:[#allocation7 + $0x6]]
    %v1187 = vld [vmem:[#allocation2] sm:$0x3f]
    %v1188 = vstv %s1186
    %v1189 = vmul.f32 %v1188, %v1187
    %v1190 = vadd.f32 %v1189, 0.0
    %s1191 = sld [smem:[#allocation7 + $0xd]]
    %v1192 = vstv %s1191
    %v1193 = vmul.f32 %v1192, %v1187
    %v1194 = vadd.f32 %v1193, 0.0
    %s1195 = sld [smem:[#allocation7 + $0x14]]
    %v1196 = vstv %s1195
    %v1197 = vmul.f32 %v1196, %v1187
    %1199 = vrot.lane.b32.xlu0 %v1197, 96
    %v1200 = vpop.permute.xlu0 %1199
    %v1201 = vrot.slane %v1200, 2
    %v1202 = vsel %vm220, %v1200, %v1201
    %v1204 = vadd.f32 %v1190, %v1202
    %s1205 = sld [smem:[#allocation7 + $0x1b]]
    %v1206 = vstv %s1205
    %v1207 = vmul.f32 %v1206, %v1187
    %1209 = vrot.lane.b32.xlu0 %v1207, 96
    %v1210 = vpop.permute.xlu0 %1209
    %v1211 = vrot.slane %v1210, 2
    %v1212 = vsel %vm220, %v1210, %v1211
    %v1214 = vadd.f32 %v1194, %v1212
    %s1215 = sld [smem:[#allocation7 + $0x22]]
    %v1216 = vstv %s1215
    %v1217 = vmul.f32 %v1216, %v1187
    %1219 = vrot.lane.b32.xlu0 %v1217, 64
    %v1220 = vpop.permute.xlu0 %1219
    %v1221 = vrot.slane %v1220, 2
    %v1222 = vsel %vm241, %v1220, %v1221
    %v1224 = vadd.f32 %v1204, %v1222
    %s1225 = sld [smem:[#allocation7 + $0x29]]
    %v1226 = vstv %s1225
    %v1227 = vmul.f32 %v1226, %v1187
    %1229 = vrot.lane.b32.xlu0 %v1227, 64
    %v1230 = vpop.permute.xlu0 %1229
    %v1231 = vrot.slane %v1230, 2
    %v1232 = vsel %vm241, %v1230, %v1231
    %v1234 = vadd.f32 %v1214, %v1232
    %s1235 = sld [smem:[#allocation7 + $0x30]]
    %v1236 = vstv %s1235
    %v1237 = vmul.f32 %v1236, %v1187
    %1239 = vrot.lane.b32.xlu0 %v1237, 32
    %v1240 = vpop.permute.xlu0 %1239
    %v1241 = vrot.slane %v1240, 2
    %v1242 = vsel %vm262, %v1240, %v1241
    %v1244 = vadd.f32 %v1224, %v1242
    %s1245 = sld [smem:[#allocation7 + $0x37]]
    %v1246 = vld [vmem:[%s45] sm:$0x3f]
    %v1247 = vstv %s1245
    %v1248 = vmul.f32 %v1247, %v1246
    %1250 = vrot.lane.b32.xlu0 %v1248, 16
    %v1251 = vpop.permute.xlu0 %1250
    %v1252 = vrot.slane %v1251, 6
    %v1253 = vsel %vm274, %v1252, %v1251
    %v1255 = vadd.f32 %v1234, %v1253
    %s1256 = sld [smem:[#allocation7 + $0x3e]]
    %v1257 = vstv %s1256
    %v1258 = vmul.f32 %v1257, %v1246
    %1260 = vrot.lane.b32.xlu0 %v1258, 112
    %v1261 = vpop.permute.xlu0 %1260
    %v1262 = vrot.slane %v1261, 2
    %v1263 = vsel %vm286, %v1261, %v1262
    %v1265 = vadd.f32 %v1244, %v1263
    %s1266 = sld [smem:[#allocation7 + $0x45]]
    %v1267 = vstv %s1266
    %v1268 = vmul.f32 %v1267, %v1246
    %1270 = vrot.lane.b32.xlu0 %v1268, 112
    %v1271 = vpop.permute.xlu0 %1270
    %v1272 = vrot.slane %v1271, 2
    %v1273 = vsel %vm286, %v1271, %v1272
    %v1275 = vadd.f32 %v1255, %v1273
    %s1276 = sld [smem:[#allocation7 + $0x4c]]
    %v1277 = vstv %s1276
    %v1278 = vmul.f32 %v1277, %v1246
    %1280 = vrot.lane.b32.xlu0 %v1278, 80
    %v1281 = vpop.permute.xlu0 %1280
    %v1282 = vrot.slane %v1281, 2
    %v1283 = vsel %vm307, %v1281, %v1282
    %v1285 = vadd.f32 %v1265, %v1283
    %s1286 = sld [smem:[#allocation7 + $0x53]]
    %v1287 = vstv %s1286
    %v1288 = vmul.f32 %v1287, %v1246
    %1290 = vrot.lane.b32.xlu0 %v1288, 80
    %v1291 = vpop.permute.xlu0 %1290
    %v1292 = vrot.slane %v1291, 2
    %v1293 = vsel %vm307, %v1291, %v1292
    %v1295 = vadd.f32 %v1275, %v1293
    %s1296 = sld [smem:[#allocation7 + $0x5a]]
    %v1297 = vstv %s1296
    %v1298 = vmul.f32 %v1297, %v1246
    %1300 = vrot.lane.b32.xlu0 %v1298, 48
    %v1301 = vpop.permute.xlu0 %1300
    %v1302 = vrot.slane %v1301, 2
    %v1303 = vsel %vm328, %v1301, %v1302
    %v1305 = vadd.f32 %v1285, %v1303
    %s1306 = sld [smem:[#allocation7 + $0x61]]
    %v1307 = vstv %s1306
    %v1308 = vmul.f32 %v1307, %v1246
    %1310 = vrot.lane.b32.xlu0 %v1308, 48
    %v1311 = vpop.permute.xlu0 %1310
    %v1312 = vrot.slane %v1311, 2
    %v1313 = vsel %vm328, %v1311, %v1312
    %v1315 = vadd.f32 %v1295, %v1313
    %1317 = vrot.lane.b32.xlu0 %v1315, 112
    %v1318 = vpop.permute.xlu0 %1317
    %v1319 = vrot.slane %v1318, 2
    %v1320 = vsel %vm286, %v1318, %v1319
    %v1322 = vadd.f32 %v1305, %v1320
    %vm1323 = vcmp.lt.f32.partialorder %v201, 13.0
    %vm1324 = vcmp.lt.f32.partialorder %v202, 13.0
    %vm1325 = vmand %vm991, %vm1323
    %vm1326 = vmand %vm992, %vm1324
    %v1327 = vsel %vm1325, 1, 0
    %v1328 = vsel %vm1326, 1, 0
    %vm1329 = vcmp.eq.s32.totalorder %v1327, 1
    %vm1330 = vcmp.eq.s32.totalorder %v1328, 1
    %1332 = vst [vmem:[#allocation1] ss:$4 sm:$0xff] %v1322
    %v1333 = vld.sshfl [vmem:[#allocation1] sm:$0xff pattern:$0x73625140]
    %v1334 = vld.sshfl [vmem:[#allocation1 + $0x8] sm:$0xff pattern:$0x73625140]
    %v1335 = vld.sshfl [vmem:[#allocation1 + $0x10] sm:$0xff pattern:$0x73625140]
    %1336 = vrot.lane.b32.xlu0 %v1333, 122
    %v1337 = vpop.permute.xlu0 %1336
    %1338 = vrot.lane.b32.xlu0 %v1334, 122
    %v1339 = vpop.permute.xlu0 %1338
    %1340 = vrot.lane.b32.xlu0 %v1335, 122
    %v1341 = vpop.permute.xlu0 %1340
    %vm1342 = vcmask 998400
    %v1343 = vsel %vm1342, %v1337, %v1339
    %v1344 = vsel %vm1342, %v1339, %v1341
    %v1347 = vsel %vm1329, %v1343, 0.0
    %v1348 = vsel %vm1330, %v1344, 0.0
    %v1349 = vadd.f32 %v1184, %v1347
    %v1350 = vadd.f32 %v1185, %v1348
    %v1351 = vsub.f32 0.0, %v1349
    %v1352 = vsub.f32 0.0, %v1350
    %v1353 = vmul.f32 %v1351, 1.442695
    %v1354 = vpow.pop %v1353
    %v1355 = vmul.f32 %v1352, 1.442695
    %v1356 = vpow.pop %v1355
    %v1357 = vadd.f32 %v1354, 1.0
    %v1358 = vadd.f32 %v1356, 1.0
    %v1359 = vrcp.pop %v1357
    %v1360 = vmul.f32 %v1357, %v1359
    %v1361 = vsub.f32 1.0, %v1360
    %v1362 = vmul.f32 %v1359, %v1361
    %v1363 = vadd.f32 %v1359, %v1362
    %vm1364 = vweird.f32 %v1357
    %vm1365 = vweird.f32 %v1359
    %vm1366 = vmor %vm1364, %vm1365
    %v1367 = vsel %vm1366, %v1359, %v1363
    %v1368 = vand.u32 2147483647, %v1357
    %vm1369 = vcmp.eq.f32.partialorder %v1368, 8.507059e+37
    %v1370 = vand.u32 %v1357, 2147483648
    %v1371 = vor.u32 1.1754944e-38, %v1370
    %v1372 = vsel %vm1369, %v1371, %v1367
    %v1373 = vmul.f32 1.0, %v1372
    %v1374 = vrcp.pop %v1358
    %v1375 = vmul.f32 %v1358, %v1374
    %v1376 = vsub.f32 1.0, %v1375
    %v1377 = vmul.f32 %v1374, %v1376
    %v1378 = vadd.f32 %v1374, %v1377
    %vm1379 = vweird.f32 %v1358
    %vm1380 = vweird.f32 %v1374
    %vm1381 = vmor %vm1379, %vm1380
    %v1382 = vsel %vm1381, %v1374, %v1378
    %v1383 = vand.u32 2147483647, %v1358
    %vm1384 = vcmp.eq.f32.partialorder %v1383, 8.507059e+37
    %v1385 = vand.u32 %v1358, 2147483648
    %v1386 = vor.u32 1.1754944e-38, %v1385
    %v1387 = vsel %vm1384, %v1386, %v1382
    %v1388 = vmul.f32 1.0, %v1387
    %v1391 = vrot.slane %v1388, 6
    %vm1392 = vcmask 1041408
    %v1393 = vsel %vm1392, %v1373, %v1391
    %1395 = vst [vmem:[#allocation8] sm:$0xf] %v1393
    // Predicated region
    $region18: #{tpu_custom_call.1} parent=1 // pred_check
      _
    $region19: #{tpu_custom_call.1} parent=1 // pred_check_branch
      %1397 = sbr.rel (0) target = $region21
    $region20: #{tpu_custom_call.1} parent=1 // pred_region
      %1399 = vsyncadd [#allocation5], 0
      %s1401 = sshll.u32 [#allocation8], 4
      %s1402 = int_to_ptr.vmem [resolvable:$true] %s1401
      %s1403 = sshll.u32 %s2, 4
      %s1404 = int_to_ptr.hbm [resolvable:$true] %s1403
      %1406 = dma.vmem_to_hbm [thread:$0]  %s1402, 64, %s1404, [#allocation5]
    $region21: #{tpu_custom_call.1} parent=1 // pred_fallthru
      _
    // Predicated region
    $region22: #{tpu_custom_call.1} parent=1 // pred_check
      _
    $region23: #{tpu_custom_call.1} parent=1 // pred_check_branch
      %1408 = sbr.rel (0) target = $region25
    $region24: #{tpu_custom_call.1} parent=1 // pred_region
      %1410 = dma.done [#allocation5], 64
    $region25: #{tpu_custom_call.1} parent=1 // pred_fallthru
      _
    %1411 = vsyncpa [#allocation4], 1
    %1412 = vsyncpa [#allocation5], 1
    %1413 = vsyncpa [#allocation6], 1

</llo_original>
